<compile_context>
chip_gen: v6e
topology: v6e:2x2x1
jax: 0.10.0
libtpu: 0.0.40
codegen_flags: <defaults>
</compile_context>

<pallas_src>
import jax
import jax.numpy as jnp
from jax.experimental import pallas as pl
from jax.experimental.pallas import tpu as pltpu

_SUBLANE = 8
_LANE = 128


def _round_up(x, m):
    return ((x + m - 1) // m) * m


def linear_add_kernel(x_ref, w_ref, b_ref, o_ref):
    # y = x @ W  (weight already transposed on host), f32 accumulate on the MXU.
    y = jnp.dot(x_ref[...], w_ref[...], preferred_element_type=jnp.float32)
    # bias already has k folded in
    o_ref[...] = y + b_ref[...]


def linear_add(x, weight, bias, k=3, *, tm_max=4096, use_pallas=None):
    """x: (N, in_f) f32; weight: (out_f, in_f) f32; bias: (out_f,) f32.

    Returns (N, out_f) f32 = x @ weight.T + bias + k.
    """
    n, in_f = x.shape
    out_f, in_f_w = weight.shape
    assert in_f == in_f_w

    # Fold the constant k into the bias on the host.
    b = (bias.astype(jnp.float32) + jnp.float32(k)).reshape(1, out_f)

    # Tiny-N (e.g. the production (1, 128) shape): launch + DMA overhead
    # dominates any kernel; let XLA fuse a plain matmul instead.
    if use_pallas is None:
        use_pallas = n >= 1024
    if not use_pallas:
        return x.astype(jnp.float32) @ weight.astype(jnp.float32).T + b

    # Host-side transpose so the kernel contraction is the standard MXU path.
    w_t = weight.astype(jnp.float32).T  # (in_f, out_f)

    # Row tile: large enough to amortize the ~0.35 us per-step overhead against
    # HBM bandwidth (esp. on v7x's 3.2 TB/s).  tm is a multiple of 8 whenever
    # it is smaller than n (BlockSpec (8,128) divisibility rule).
    tm = min(tm_max, n)
    if pl.cdiv(n, tm) < 2 and n >= 2 * _SUBLANE:
        # Keep >= 2 grid steps so the "parallel" row axis can shard across the
        # two TensorCores on v7x; harmless on single-TC parts.
        tm = _round_up(pl.cdiv(n, 2), _SUBLANE)
    grid = (pl.cdiv(n, tm),)

    # Explicit VMEM budget (the (tm, out_f) output block is lane-padded to 128
    # lanes in VMEM, costing the same as the x tile).
    x_tile_bytes = tm * in_f * 4
    out_tile_bytes = tm * _round_up(out_f, _LANE) * 4
    w_tile_bytes = _round_up(in_f, _SUBLANE) * _round_up(out_f, _LANE) * 4
    b_tile_bytes = _SUBLANE * _LANE * 4
    vmem_limit = 2 * (x_tile_bytes + out_tile_bytes + w_tile_bytes + b_tile_bytes)
    vmem_limit += 4 << 20  # headroom for compiler-internal scratch
    vmem_limit = min(vmem_limit, 64 << 20)

    return pl.pallas_call(
        linear_add_kernel,
        out_shape=jax.ShapeDtypeStruct((n, out_f), jnp.float32),
        grid=grid,
        in_specs=[
            pl.BlockSpec((tm, in_f), lambda i: (i, 0)),       # x: streamed by row tile
            pl.BlockSpec((in_f, out_f), lambda i: (0, 0)),    # weight^T: resident
            pl.BlockSpec((1, out_f), lambda i: (0, 0)),       # bias (+k): resident
        ],
        out_specs=pl.BlockSpec((tm, out_f), lambda i: (i, 0)),
        compiler_params=pltpu.CompilerParams(
            dimension_semantics=("parallel",),
            vmem_limit_bytes=vmem_limit,
        ),
    )(x, w_t, b)


if __name__ == "__main__":
    key = jax.random.PRNGKey(0)
    kx, kw, kb, kx2 = jax.random.split(key, 4)

    # Deterministic Linear(128, 8) params (uniform init like PyTorch default).
    bound = 1.0 / jnp.sqrt(128.0)
    weight = jax.random.uniform(kw, (8, 128), minval=-bound, maxval=bound,
                                dtype=jnp.float32)
    bias = jax.random.uniform(kb, (8,), minval=-bound, maxval=bound,
                              dtype=jnp.float32)

    # Spec shape: x1 = torch.randn(1, 128) -> tiny-N fallback path (XLA fusion).
    x1 = jax.random.normal(kx, (1, 128), dtype=jnp.float32)
    out = linear_add(x1, weight, bias, k=3)
    jax.block_until_ready(out)
    ref = x1 @ weight.T + bias + 3.0
    assert out.shape == (1, 8)
    assert jnp.allclose(out, ref, atol=1e-5, rtol=1e-5)

    # Batched input exercises the Pallas row-tiled grid path (>= 2 grid steps).
    x_big = jax.random.normal(kx2, (4096, 128), dtype=jnp.float32)
    out_big = linear_add(x_big, weight, bias, k=3)
    jax.block_until_ready(out_big)
    ref_big = x_big @ weight.T + bias + 3.0
    assert out_big.shape == (4096, 8)
    assert jnp.allclose(out_big, ref_big, atol=1e-4, rtol=1e-4)

    print("KERNEL_OK")
</pallas_src>

<mosaic_0001>
module attributes {stable_mosaic.version = 11 : i64} {
  func.func @linear_add_kernel(%arg0: i32, %arg1: memref<2048x128xf32, #tpu.memory_space<vmem>>, %arg2: memref<128x8xf32, #tpu.memory_space<vmem>>, %arg3: memref<1x8xf32, #tpu.memory_space<vmem>>, %arg4: memref<2048x8xf32, #tpu.memory_space<vmem>>) attributes {dimension_semantics = [#tpu.dimension_semantics<parallel>], iteration_bounds = array<i64: 2>, scalar_prefetch = 0 : i64, scratch_operands = 0 : i64, tpu.core_type = #tpu.core_type<tc>, window_params = [{transform_indices = @transform_0, window_bounds = array<i64: 2048, 128>}, {pipeline_mode = #tpu.pipeline_mode<synchronous>, transform_indices = @transform_1, window_bounds = array<i64: 128, 8>}, {pipeline_mode = #tpu.pipeline_mode<synchronous>, transform_indices = @transform_2, window_bounds = array<i64: 1, 8>}, {transform_indices = @transform_3, window_bounds = array<i64: 2048, 8>}]} {
    %c0 = arith.constant 0 : index
    %c0_0 = arith.constant 0 : index
    %0 = vector.load %arg1[%c0, %c0_0] : memref<2048x128xf32, #tpu.memory_space<vmem>>, vector<2048x128xf32>
    %c0_1 = arith.constant 0 : index
    %c0_2 = arith.constant 0 : index
    %1 = vector.load %arg2[%c0_1, %c0_2] : memref<128x8xf32, #tpu.memory_space<vmem>>, vector<128x8xf32>
    %cst = arith.constant dense<0.000000e+00> : vector<2048x8xf32>
    %2 = tpu.matmul %0, %1, %cst {dimension_numbers = #tpu.dot_dimension_numbers<[1], [0], [0], [1], [0, 0, 1, 1], [], []>} : vector<2048x128xf32>, vector<128x8xf32>, vector<2048x8xf32> -> vector<2048x8xf32>
    %c0_3 = arith.constant 0 : index
    %c0_4 = arith.constant 0 : index
    %3 = vector.load %arg3[%c0_3, %c0_4] : memref<1x8xf32, #tpu.memory_space<vmem>>, vector<1x8xf32>
    %4 = vector.broadcast %3 : vector<1x8xf32> to vector<2048x8xf32>
    %5 = arith.addf %2, %4 : vector<2048x8xf32>
    %c0_5 = arith.constant 0 : index
    %c0_6 = arith.constant 0 : index
    %6 = vector.load %arg4[%c0_5, %c0_6] : memref<2048x8xf32, #tpu.memory_space<vmem>>, vector<2048x8xf32>
    tpu.vector_store %arg4[%c0_5, %c0_6], %5 {strides = array<i32>} : memref<2048x8xf32, #tpu.memory_space<vmem>>, vector<2048x8xf32>,
    return
  }
  func.func @transform_0(%arg0: i32) -> (i32, i32) {
    %c0_i32 = arith.constant 0 : i32
    %c0_i32_0 = arith.constant 0 : i32
    return %arg0, %c0_i32 : i32, i32
  }
  func.func @transform_1(%arg0: i32) -> (i32, i32) {
    %c0_i32 = arith.constant 0 : i32
    %c0_i32_0 = arith.constant 0 : i32
    %c0_i32_1 = arith.constant 0 : i32
    return %c0_i32, %c0_i32_0 : i32, i32
  }
  func.func @transform_2(%arg0: i32) -> (i32, i32) {
    %c0_i32 = arith.constant 0 : i32
    %c0_i32_0 = arith.constant 0 : i32
    %c0_i32_1 = arith.constant 0 : i32
    return %c0_i32, %c0_i32_0 : i32, i32
  }
  func.func @transform_3(%arg0: i32) -> (i32, i32) {
    %c0_i32 = arith.constant 0 : i32
    %c0_i32_0 = arith.constant 0 : i32
    return %arg0, %c0_i32 : i32, i32
  }
}

</mosaic_0001>

<llo_original>
// kernel: tpu_custom_call.1
$region0: #{tpu_custom_call.1}
  #allocation0 [shape = 'u32[]', space=smem, size = 0x4, offset = 0x4, fixed_abs, tag = 'smem constant byte address 0x4 - core index']
  #allocation1 [shape = 'u32[144,128]{1,0:T(1,128)}', space=vmem, size = 0x12000, scoped, tag = 'internal scratch']
  %s0 = inlined_call_operand.hbm [shape: f32[4096,128], index: 0, kind: input, shape index: {}]
  %s1 = inlined_call_operand.vmem [shape: f32[128,8], index: 1, kind: input, shape index: {}]
  %s2 = inlined_call_operand.hbm [shape: f32[1,8], index: 2, kind: input, shape index: {}]
  %s3 = inlined_call_operand.vmem [shape: f32[4096,8], index: 3, kind: output, shape index: {}]
  %s4 = sld [smem:[#allocation0]]
  $region53: #{tpu_custom_call.1} parent=0
    _
  %s6 = ssub.s32 1, %s4
  %s7 = scalar_select 0, %s6, %s4
  $region1: #{tpu_custom_call.1} parent=0
    #allocation2 [shape = 'u8[2097152]{0}', space=vmem, size = 0x200000, scoped, tag = 'input window, operand 0']
    #allocation3 [shape = 's32[2]{0}', space=sflag, size = 0x8, scoped, tag = 'scoped memory for tpu_custom_call.1']
    #allocation4 [shape = 'u8[512]{0}', space=vmem, size = 0x400, scoped, tag = 'input window, operand 2, single buffered']
    #allocation5 [shape = 's32[1]{0}', space=sflag, size = 0x4, scoped, tag = 'scoped memory for tpu_custom_call.1']
    %8 = vsyncpa [#allocation3], 0
    %s9 = scalar_lea.sflag [#allocation3], 1
    %10 = vsyncpa %s9, 0
    %11 = vsyncpa [#allocation5], 0
    loop: start=0, step=1, limit=4
    $region2: #{tpu_custom_call.1} parent=1 // loop_pre_header
      _
    $region3: #{tpu_custom_call.1} parent=1 // loop_header
      %s13 = sphi 0, %s17
      %p14 = scmp.ge.s32.totalorder %s13, 4
      %s23 = sphi 0, %s25
      %s26 = sphi 0, %s23
      %s27 = sphi 0, %s26
      %s43 = sphi 0, %s27
      %s47 = sphi 0, %s47
      %s49 = sphi 0, %s47
      %s50 = sphi 0, %s49
      %s64 = sphi 0, %s50
      %s68 = sphi 0, %s68
      %s70 = sphi 0, %s68
      %s71 = sphi 0, %s70
      %s85 = sphi 0, %s71
      %s91 = sphi 0, %s93
      %s94 = sphi 0, %s91
      %s95 = sphi 0, %s94
      %s111 = sphi 0, %s95
    $region4: #{tpu_custom_call.1} parent=1 // loop_header_branch
      %16 = sbr.rel (%p14) target = $region8
    $region5: #{tpu_custom_call.1} parent=1 // loop_body
      %s18 = ssub.s32 %s13, 1
      %s19 = ssub.s32 %s13, 2
      %s20 = sadd.s32 %s13, 1
      %s21 = ssub.s32 %s13, %s20
      %p22 = scmp.eq.s32.totalorder %s21, 0
      %s24 = sadd.s32 %s23, 1
      %s25 = scalar_select %p22, %s23, %s24
      %p28 = pneg %p22
      %p29 = scmp.eq.s32.totalorder %s13, 1
      %p30 = por %p28, %p29
      %p31 = scmp.ne.s32.totalorder %s23, %s26
      %p32 = scmp.eq.s32.totalorder %s13, 0
      %p33 = por %p31, %p32
      %p34 = scmp.ne.s32.totalorder %s23, %s26
      %p35 = scmp.eq.s32.totalorder %s18, 1
      %p36 = por %p34, %p35
      %p37 = scmp.ne.s32.totalorder %s26, %s27
      %p38 = scmp.eq.s32.totalorder %s18, 0
      %p39 = por %p37, %p38
      %p40 = scmp.ne.s32.totalorder %s26, %s27
      %p41 = scmp.eq.s32.totalorder %s19, 1
      %p42 = por %p40, %p41
      %p44 = scmp.ne.s32.totalorder %s27, %s43
      %p45 = scmp.eq.s32.totalorder %s19, 0
      %p46 = por %p44, %p45
      %s48 = sadd.s32 %s47, 1
      %p51 = scmp.eq.s32.totalorder %s13, 1
      %p52 = scmp.ne.s32.totalorder %s47, %s49
      %p53 = scmp.eq.s32.totalorder %s13, 0
      %p54 = por %p52, %p53
      %p55 = scmp.ne.s32.totalorder %s47, %s49
      %p56 = scmp.eq.s32.totalorder %s18, 1
      %p57 = por %p55, %p56
      %p58 = scmp.ne.s32.totalorder %s49, %s50
      %p59 = scmp.eq.s32.totalorder %s18, 0
      %p60 = por %p58, %p59
      %p61 = scmp.ne.s32.totalorder %s49, %s50
      %p62 = scmp.eq.s32.totalorder %s19, 1
      %p63 = por %p61, %p62
      %p65 = scmp.ne.s32.totalorder %s50, %s64
      %p66 = scmp.eq.s32.totalorder %s19, 0
      %p67 = por %p65, %p66
      %s69 = sadd.s32 %s68, 1
      %p72 = scmp.eq.s32.totalorder %s13, 1
      %p73 = scmp.ne.s32.totalorder %s68, %s70
      %p74 = scmp.eq.s32.totalorder %s13, 0
      %p75 = por %p73, %p74
      %p76 = scmp.ne.s32.totalorder %s68, %s70
      %p77 = scmp.eq.s32.totalorder %s18, 1
      %p78 = por %p76, %p77
      %p79 = scmp.ne.s32.totalorder %s70, %s71
      %p80 = scmp.eq.s32.totalorder %s18, 0
      %p81 = por %p79, %p80
      %p82 = scmp.ne.s32.totalorder %s70, %s71
      %p83 = scmp.eq.s32.totalorder %s19, 1
      %p84 = por %p82, %p83
      %p86 = scmp.ne.s32.totalorder %s71, %s85
      %p87 = scmp.eq.s32.totalorder %s19, 0
      %p88 = por %p86, %p87
      %s89 = ssub.s32 %s13, %s20
      %p90 = scmp.eq.s32.totalorder %s89, 0
      %s92 = sadd.s32 %s91, 1
      %s93 = scalar_select %p90, %s91, %s92
      %p96 = pneg %p90
      %p97 = scmp.eq.s32.totalorder %s13, 1
      %p98 = por %p96, %p97
      %p99 = scmp.ne.s32.totalorder %s91, %s94
      %p100 = scmp.eq.s32.totalorder %s13, 0
      %p101 = por %p99, %p100
      %p102 = scmp.ne.s32.totalorder %s91, %s94
      %p103 = scmp.eq.s32.totalorder %s18, 1
      %p104 = por %p102, %p103
      %p105 = scmp.ne.s32.totalorder %s94, %s95
      %p106 = scmp.eq.s32.totalorder %s18, 0
      %p107 = por %p105, %p106
      %p108 = scmp.ne.s32.totalorder %s94, %s95
      %p109 = scmp.eq.s32.totalorder %s19, 1
      %p110 = por %p108, %p109
      %p112 = scmp.ne.s32.totalorder %s95, %s111
      %p113 = scmp.eq.s32.totalorder %s19, 0
      %p114 = por %p112, %p113
      %p115 = scmp.le.s32.totalorder 1, %s13
      %p116 = scmp.lt.s32.totalorder %s13, 3
      %p117 = pnand %p115, %p116
      %p118 = pneg %p117
      // Predicated region
      $region9: #{tpu_custom_call.1} parent=5 // pred_check
        _
      $region10: #{tpu_custom_call.1} parent=5 // pred_check_branch
        %120 = sbr.rel (%p117) target = $region12
      $region11: #{tpu_custom_call.1} parent=5 // pred_region
        %s121 = ssub.s32 %s13, 1
        // Predicated region
        $region13: #{tpu_custom_call.1} parent=11 // pred_check
          %p122 = pneg %p60
        $region14: #{tpu_custom_call.1} parent=11 // pred_check_branch
          %124 = sbr.rel (%p122) target = $region16
        $region15: #{tpu_custom_call.1} parent=11 // pred_region
          _
        $region16: #{tpu_custom_call.1} parent=11 // pred_fallthru
          _
        // Predicated region
        $region17: #{tpu_custom_call.1} parent=11 // pred_check
          %p125 = pneg %p81
        $region18: #{tpu_custom_call.1} parent=11 // pred_check_branch
          %127 = sbr.rel (%p125) target = $region20
        $region19: #{tpu_custom_call.1} parent=11 // pred_region
          %s129 = ssub.s32 16, 16
          %130 = vsyncadd [#allocation5], %s129
          %s132 = sshll.u32 [#allocation4], 4
          %s133 = int_to_ptr.vmem [resolvable:$true] %s132
          %135 = dma.hbm_to_vmem [thread:$0]  %s2, 16, %s133, [#allocation5]
        $region20: #{tpu_custom_call.1} parent=11 // pred_fallthru
          _
      $region12: #{tpu_custom_call.1} parent=5 // pred_fallthru
        _
      %p136 = scmp.lt.s32.totalorder %s13, 2
      // Predicated region
      $region21: #{tpu_custom_call.1} parent=5 // pred_check
        %p137 = pneg %p136
      $region22: #{tpu_custom_call.1} parent=5 // pred_check_branch
        %139 = sbr.rel (%p137) target = $region24
      $region23: #{tpu_custom_call.1} parent=5 // pred_region
        // Predicated region
        $region25: #{tpu_custom_call.1} parent=23 // pred_check
          %p140 = pneg %p33
        $region26: #{tpu_custom_call.1} parent=23 // pred_check_branch
          %142 = sbr.rel (%p140) target = $region28
        $region27: #{tpu_custom_call.1} parent=23 // pred_region
          %s143 = sand.u32 %s23, 1
          %s144 = scalar_lea.sflag [#allocation3], %s143
          %s145 = sand.u32 %s23, 1
          %s146 = smul.addr %s145, 2048
          %s147 = scalar_lea.vmem [#allocation2], %s146
          %s148 = smul.u32 256, %s13
          %s150 = ssub.s32 32768, 32768
          %151 = vsyncadd %s144, %s150
          %s152 = smul.addr %s148, 128
          %s153 = scalar_lea.hbm %s0, %s152
          %s154 = sshll.u32 %s147, 4
          %s155 = int_to_ptr.vmem [resolvable:$true] %s154
          %160 = dma.hbm_to_vmem [thread:$0]  %s153, 32768, %s155, %s144, 128, 128, 8
        $region28: #{tpu_custom_call.1} parent=23 // pred_fallthru
          _
      $region24: #{tpu_custom_call.1} parent=5 // pred_fallthru
        _
      %p161 = scmp.le.s32.totalorder 1, %s13
      %p162 = scmp.lt.s32.totalorder %s13, 3
      %p163 = pnand %p161, %p162
      %p164 = pneg %p163
      // Predicated region
      $region29: #{tpu_custom_call.1} parent=5 // pred_check
        _
      $region30: #{tpu_custom_call.1} parent=5 // pred_check_branch
        %166 = sbr.rel (%p163) target = $region32
      $region31: #{tpu_custom_call.1} parent=5 // pred_region
        %s167 = ssub.s32 %s13, 1
        %s168 = sand.u32 %s26, 1
        %s169 = scalar_lea.sflag [#allocation3], %s168
        %s170 = sand.u32 %s26, 1
        %s171 = smul.addr %s170, 2048
        %s172 = scalar_lea.vmem [#allocation2], %s171
        // Predicated region
        $region33: #{tpu_custom_call.1} parent=31 // pred_check
          %p173 = pneg %p39
        $region34: #{tpu_custom_call.1} parent=31 // pred_check_branch
          %175 = sbr.rel (%p173) target = $region36
        $region35: #{tpu_custom_call.1} parent=31 // pred_region
          %176 = dma.done %s169, 32768
        $region36: #{tpu_custom_call.1} parent=31 // pred_fallthru
          _
        // Predicated region
        $region37: #{tpu_custom_call.1} parent=31 // pred_check
          %p177 = pneg %p81
        $region38: #{tpu_custom_call.1} parent=31 // pred_check_branch
          %179 = sbr.rel (%p177) target = $region40
        $region39: #{tpu_custom_call.1} parent=31 // pred_region
          %180 = dma.done [#allocation5], 16
        $region40: #{tpu_custom_call.1} parent=31 // pred_fallthru
          _
        %s181 = sand.u32 %s26, 1
        %s182 = scalar_lea.sflag [#allocation3], %s181
        %s183 = sand.u32 %s26, 1
        %s184 = smul.addr %s183, 2048
        %s185 = scalar_lea.vmem [#allocation2], %s184
        %p186 = pneg %p39
        %p187 = pneg %p36
        %p188 = pneg %p60
        %p189 = pneg %p57
        %p190 = pneg %p81
        %p191 = pneg %p78
        %p192 = pneg %p107
        %p193 = pneg %p104
        %s194 = smul.u32 256, %s18
        %p195 = scmp.lt.s32.totalorder %s194, 511
        %s196 = scalar_select %p195, %s194, 511
        %s197 = smul.addr %s196, 8
        %s198 = scalar_lea.vmem %s3, %s197
        %s199 = smul.u32 256, %s18
        %s200 = smul.u32 256, %s18
        %p201 = scmp.lt.s32.totalorder %s200, 511
        %s202 = scalar_select %p201, %s200, 511
        %s203 = smul.addr %s202, 8
        %s204 = scalar_lea.vmem %s3, %s203
        %s205 = smul.u32 256, %s18
        %v206 = vld [vmem:[%s172] sm:$0xff]
        %v207 = vld [vmem:[%s172 + $0x8] sm:$0xff]
        %v208 = vld [vmem:[%s172 + $0x10] sm:$0xff]
        %v209 = vld [vmem:[%s172 + $0x18] sm:$0xff]
        %v210 = vld [vmem:[%s172 + $0x20] sm:$0xff]
        %v211 = vld [vmem:[%s172 + $0x28] sm:$0xff]
        %v212 = vld [vmem:[%s172 + $0x30] sm:$0xff]
        %v213 = vld [vmem:[%s172 + $0x38] sm:$0xff]
        %v214 = vld [vmem:[%s172 + $0x40] sm:$0xff]
        %v215 = vld [vmem:[%s172 + $0x48] sm:$0xff]
        %v216 = vld [vmem:[%s172 + $0x50] sm:$0xff]
        %v217 = vld [vmem:[%s172 + $0x58] sm:$0xff]
        %v218 = vld [vmem:[%s172 + $0x60] sm:$0xff]
        %v219 = vld [vmem:[%s172 + $0x68] sm:$0xff]
        %v220 = vld [vmem:[%s172 + $0x70] sm:$0xff]
        %v221 = vld [vmem:[%s172 + $0x78] sm:$0xff]
        %v222 = vld [vmem:[%s172 + $0x80] sm:$0xff]
        %v223 = vld [vmem:[%s172 + $0x88] sm:$0xff]
        %v224 = vld [vmem:[%s172 + $0x90] sm:$0xff]
        %v225 = vld [vmem:[%s172 + $0x98] sm:$0xff]
        %v226 = vld [vmem:[%s172 + $0xa0] sm:$0xff]
        %v227 = vld [vmem:[%s172 + $0xa8] sm:$0xff]
        %v228 = vld [vmem:[%s172 + $0xb0] sm:$0xff]
        %v229 = vld [vmem:[%s172 + $0xb8] sm:$0xff]
        %v230 = vld [vmem:[%s172 + $0xc0] sm:$0xff]
        %v231 = vld [vmem:[%s172 + $0xc8] sm:$0xff]
        %v232 = vld [vmem:[%s172 + $0xd0] sm:$0xff]
        %v233 = vld [vmem:[%s172 + $0xd8] sm:$0xff]
        %v234 = vld [vmem:[%s172 + $0xe0] sm:$0xff]
        %v235 = vld [vmem:[%s172 + $0xe8] sm:$0xff]
        %v236 = vld [vmem:[%s172 + $0xf0] sm:$0xff]
        %v237 = vld [vmem:[%s172 + $0xf8] sm:$0xff]
        %v238 = vld [vmem:[%s172 + $0x100] sm:$0xff]
        %v239 = vld [vmem:[%s172 + $0x108] sm:$0xff]
        %v240 = vld [vmem:[%s172 + $0x110] sm:$0xff]
        %v241 = vld [vmem:[%s172 + $0x118] sm:$0xff]
        %v242 = vld [vmem:[%s172 + $0x120] sm:$0xff]
        %v243 = vld [vmem:[%s172 + $0x128] sm:$0xff]
        %v244 = vld [vmem:[%s172 + $0x130] sm:$0xff]
        %v245 = vld [vmem:[%s172 + $0x138] sm:$0xff]
        %v246 = vld [vmem:[%s172 + $0x140] sm:$0xff]
        %v247 = vld [vmem:[%s172 + $0x148] sm:$0xff]
        %v248 = vld [vmem:[%s172 + $0x150] sm:$0xff]
        %v249 = vld [vmem:[%s172 + $0x158] sm:$0xff]
        %v250 = vld [vmem:[%s172 + $0x160] sm:$0xff]
        %v251 = vld [vmem:[%s172 + $0x168] sm:$0xff]
        %v252 = vld [vmem:[%s172 + $0x170] sm:$0xff]
        %v253 = vld [vmem:[%s172 + $0x178] sm:$0xff]
        %v254 = vld [vmem:[%s172 + $0x180] sm:$0xff]
        %v255 = vld [vmem:[%s172 + $0x188] sm:$0xff]
        %v256 = vld [vmem:[%s172 + $0x190] sm:$0xff]
        %v257 = vld [vmem:[%s172 + $0x198] sm:$0xff]
        %v258 = vld [vmem:[%s172 + $0x1a0] sm:$0xff]
        %v259 = vld [vmem:[%s172 + $0x1a8] sm:$0xff]
        %v260 = vld [vmem:[%s172 + $0x1b0] sm:$0xff]
        %v261 = vld [vmem:[%s172 + $0x1b8] sm:$0xff]
        %v262 = vld [vmem:[%s172 + $0x1c0] sm:$0xff]
        %v263 = vld [vmem:[%s172 + $0x1c8] sm:$0xff]
        %v264 = vld [vmem:[%s172 + $0x1d0] sm:$0xff]
        %v265 = vld [vmem:[%s172 + $0x1d8] sm:$0xff]
        %v266 = vld [vmem:[%s172 + $0x1e0] sm:$0xff]
        %v267 = vld [vmem:[%s172 + $0x1e8] sm:$0xff]
        %v268 = vld [vmem:[%s172 + $0x1f0] sm:$0xff]
        %v269 = vld [vmem:[%s172 + $0x1f8] sm:$0xff]
        %v270 = vld [vmem:[%s172 + $0x200] sm:$0xff]
        %v271 = vld [vmem:[%s172 + $0x208] sm:$0xff]
        %v272 = vld [vmem:[%s172 + $0x210] sm:$0xff]
        %v273 = vld [vmem:[%s172 + $0x218] sm:$0xff]
        %v274 = vld [vmem:[%s172 + $0x220] sm:$0xff]
        %v275 = vld [vmem:[%s172 + $0x228] sm:$0xff]
        %v276 = vld [vmem:[%s172 + $0x230] sm:$0xff]
        %v277 = vld [vmem:[%s172 + $0x238] sm:$0xff]
        %v278 = vld [vmem:[%s172 + $0x240] sm:$0xff]
        %v279 = vld [vmem:[%s172 + $0x248] sm:$0xff]
        %v280 = vld [vmem:[%s172 + $0x250] sm:$0xff]
        %v281 = vld [vmem:[%s172 + $0x258] sm:$0xff]
        %v282 = vld [vmem:[%s172 + $0x260] sm:$0xff]
        %v283 = vld [vmem:[%s172 + $0x268] sm:$0xff]
        %v284 = vld [vmem:[%s172 + $0x270] sm:$0xff]
        %v285 = vld [vmem:[%s172 + $0x278] sm:$0xff]
        %v286 = vld [vmem:[%s172 + $0x280] sm:$0xff]
        %v287 = vld [vmem:[%s172 + $0x288] sm:$0xff]
        %v288 = vld [vmem:[%s172 + $0x290] sm:$0xff]
        %v289 = vld [vmem:[%s172 + $0x298] sm:$0xff]
        %v290 = vld [vmem:[%s172 + $0x2a0] sm:$0xff]
        %v291 = vld [vmem:[%s172 + $0x2a8] sm:$0xff]
        %v292 = vld [vmem:[%s172 + $0x2b0] sm:$0xff]
        %v293 = vld [vmem:[%s172 + $0x2b8] sm:$0xff]
        %v294 = vld [vmem:[%s172 + $0x2c0] sm:$0xff]
        %v295 = vld [vmem:[%s172 + $0x2c8] sm:$0xff]
        %v296 = vld [vmem:[%s172 + $0x2d0] sm:$0xff]
        %v297 = vld [vmem:[%s172 + $0x2d8] sm:$0xff]
        %v298 = vld [vmem:[%s172 + $0x2e0] sm:$0xff]
        %v299 = vld [vmem:[%s172 + $0x2e8] sm:$0xff]
        %v300 = vld [vmem:[%s172 + $0x2f0] sm:$0xff]
        %v301 = vld [vmem:[%s172 + $0x2f8] sm:$0xff]
        %v302 = vld [vmem:[%s172 + $0x300] sm:$0xff]
        %v303 = vld [vmem:[%s172 + $0x308] sm:$0xff]
        %v304 = vld [vmem:[%s172 + $0x310] sm:$0xff]
        %v305 = vld [vmem:[%s172 + $0x318] sm:$0xff]
        %v306 = vld [vmem:[%s172 + $0x320] sm:$0xff]
        %v307 = vld [vmem:[%s172 + $0x328] sm:$0xff]
        %v308 = vld [vmem:[%s172 + $0x330] sm:$0xff]
        %v309 = vld [vmem:[%s172 + $0x338] sm:$0xff]
        %v310 = vld [vmem:[%s172 + $0x340] sm:$0xff]
        %v311 = vld [vmem:[%s172 + $0x348] sm:$0xff]
        %v312 = vld [vmem:[%s172 + $0x350] sm:$0xff]
        %v313 = vld [vmem:[%s172 + $0x358] sm:$0xff]
        %v314 = vld [vmem:[%s172 + $0x360] sm:$0xff]
        %v315 = vld [vmem:[%s172 + $0x368] sm:$0xff]
        %v316 = vld [vmem:[%s172 + $0x370] sm:$0xff]
        %v317 = vld [vmem:[%s172 + $0x378] sm:$0xff]
        %v318 = vld [vmem:[%s172 + $0x380] sm:$0xff]
        %v319 = vld [vmem:[%s172 + $0x388] sm:$0xff]
        %v320 = vld [vmem:[%s172 + $0x390] sm:$0xff]
        %v321 = vld [vmem:[%s172 + $0x398] sm:$0xff]
        %v322 = vld [vmem:[%s172 + $0x3a0] sm:$0xff]
        %v323 = vld [vmem:[%s172 + $0x3a8] sm:$0xff]
        %v324 = vld [vmem:[%s172 + $0x3b0] sm:$0xff]
        %v325 = vld [vmem:[%s172 + $0x3b8] sm:$0xff]
        %v326 = vld [vmem:[%s172 + $0x3c0] sm:$0xff]
        %v327 = vld [vmem:[%s172 + $0x3c8] sm:$0xff]
        %v328 = vld [vmem:[%s172 + $0x3d0] sm:$0xff]
        %v329 = vld [vmem:[%s172 + $0x3d8] sm:$0xff]
        %v330 = vld [vmem:[%s172 + $0x3e0] sm:$0xff]
        %v331 = vld [vmem:[%s172 + $0x3e8] sm:$0xff]
        %v332 = vld [vmem:[%s172 + $0x3f0] sm:$0xff]
        %v333 = vld [vmem:[%s172 + $0x3f8] sm:$0xff]
        %v334 = vld [vmem:[%s172 + $0x400] sm:$0xff]
        %v335 = vld [vmem:[%s172 + $0x408] sm:$0xff]
        %v336 = vld [vmem:[%s172 + $0x410] sm:$0xff]
        %v337 = vld [vmem:[%s172 + $0x418] sm:$0xff]
        %v338 = vld [vmem:[%s172 + $0x420] sm:$0xff]
        %v339 = vld [vmem:[%s172 + $0x428] sm:$0xff]
        %v340 = vld [vmem:[%s172 + $0x430] sm:$0xff]
        %v341 = vld [vmem:[%s172 + $0x438] sm:$0xff]
        %v342 = vld [vmem:[%s172 + $0x440] sm:$0xff]
        %v343 = vld [vmem:[%s172 + $0x448] sm:$0xff]
        %v344 = vld [vmem:[%s172 + $0x450] sm:$0xff]
        %v345 = vld [vmem:[%s172 + $0x458] sm:$0xff]
        %v346 = vld [vmem:[%s172 + $0x460] sm:$0xff]
        %v347 = vld [vmem:[%s172 + $0x468] sm:$0xff]
        %v348 = vld [vmem:[%s172 + $0x470] sm:$0xff]
        %v349 = vld [vmem:[%s172 + $0x478] sm:$0xff]
        %v350 = vld [vmem:[%s172 + $0x480] sm:$0xff]
        %v351 = vld [vmem:[%s172 + $0x488] sm:$0xff]
        %v352 = vld [vmem:[%s172 + $0x490] sm:$0xff]
        %v353 = vld [vmem:[%s172 + $0x498] sm:$0xff]
        %v354 = vld [vmem:[%s172 + $0x4a0] sm:$0xff]
        %v355 = vld [vmem:[%s172 + $0x4a8] sm:$0xff]
        %v356 = vld [vmem:[%s172 + $0x4b0] sm:$0xff]
        %v357 = vld [vmem:[%s172 + $0x4b8] sm:$0xff]
        %v358 = vld [vmem:[%s172 + $0x4c0] sm:$0xff]
        %v359 = vld [vmem:[%s172 + $0x4c8] sm:$0xff]
        %v360 = vld [vmem:[%s172 + $0x4d0] sm:$0xff]
        %v361 = vld [vmem:[%s172 + $0x4d8] sm:$0xff]
        %v362 = vld [vmem:[%s172 + $0x4e0] sm:$0xff]
        %v363 = vld [vmem:[%s172 + $0x4e8] sm:$0xff]
        %v364 = vld [vmem:[%s172 + $0x4f0] sm:$0xff]
        %v365 = vld [vmem:[%s172 + $0x4f8] sm:$0xff]
        %v366 = vld [vmem:[%s172 + $0x500] sm:$0xff]
        %v367 = vld [vmem:[%s172 + $0x508] sm:$0xff]
        %v368 = vld [vmem:[%s172 + $0x510] sm:$0xff]
        %v369 = vld [vmem:[%s172 + $0x518] sm:$0xff]
        %v370 = vld [vmem:[%s172 + $0x520] sm:$0xff]
        %v371 = vld [vmem:[%s172 + $0x528] sm:$0xff]
        %v372 = vld [vmem:[%s172 + $0x530] sm:$0xff]
        %v373 = vld [vmem:[%s172 + $0x538] sm:$0xff]
        %v374 = vld [vmem:[%s172 + $0x540] sm:$0xff]
        %v375 = vld [vmem:[%s172 + $0x548] sm:$0xff]
        %v376 = vld [vmem:[%s172 + $0x550] sm:$0xff]
        %v377 = vld [vmem:[%s172 + $0x558] sm:$0xff]
        %v378 = vld [vmem:[%s172 + $0x560] sm:$0xff]
        %v379 = vld [vmem:[%s172 + $0x568] sm:$0xff]
        %v380 = vld [vmem:[%s172 + $0x570] sm:$0xff]
        %v381 = vld [vmem:[%s172 + $0x578] sm:$0xff]
        %v382 = vld [vmem:[%s172 + $0x580] sm:$0xff]
        %v383 = vld [vmem:[%s172 + $0x588] sm:$0xff]
        %v384 = vld [vmem:[%s172 + $0x590] sm:$0xff]
        %v385 = vld [vmem:[%s172 + $0x598] sm:$0xff]
        %v386 = vld [vmem:[%s172 + $0x5a0] sm:$0xff]
        %v387 = vld [vmem:[%s172 + $0x5a8] sm:$0xff]
        %v388 = vld [vmem:[%s172 + $0x5b0] sm:$0xff]
        %v389 = vld [vmem:[%s172 + $0x5b8] sm:$0xff]
        %v390 = vld [vmem:[%s172 + $0x5c0] sm:$0xff]
        %v391 = vld [vmem:[%s172 + $0x5c8] sm:$0xff]
        %v392 = vld [vmem:[%s172 + $0x5d0] sm:$0xff]
        %v393 = vld [vmem:[%s172 + $0x5d8] sm:$0xff]
        %v394 = vld [vmem:[%s172 + $0x5e0] sm:$0xff]
        %v395 = vld [vmem:[%s172 + $0x5e8] sm:$0xff]
        %v396 = vld [vmem:[%s172 + $0x5f0] sm:$0xff]
        %v397 = vld [vmem:[%s172 + $0x5f8] sm:$0xff]
        %v398 = vld [vmem:[%s172 + $0x600] sm:$0xff]
        %v399 = vld [vmem:[%s172 + $0x608] sm:$0xff]
        %v400 = vld [vmem:[%s172 + $0x610] sm:$0xff]
        %v401 = vld [vmem:[%s172 + $0x618] sm:$0xff]
        %v402 = vld [vmem:[%s172 + $0x620] sm:$0xff]
        %v403 = vld [vmem:[%s172 + $0x628] sm:$0xff]
        %v404 = vld [vmem:[%s172 + $0x630] sm:$0xff]
        %v405 = vld [vmem:[%s172 + $0x638] sm:$0xff]
        %v406 = vld [vmem:[%s172 + $0x640] sm:$0xff]
        %v407 = vld [vmem:[%s172 + $0x648] sm:$0xff]
        %v408 = vld [vmem:[%s172 + $0x650] sm:$0xff]
        %v409 = vld [vmem:[%s172 + $0x658] sm:$0xff]
        %v410 = vld [vmem:[%s172 + $0x660] sm:$0xff]
        %v411 = vld [vmem:[%s172 + $0x668] sm:$0xff]
        %v412 = vld [vmem:[%s172 + $0x670] sm:$0xff]
        %v413 = vld [vmem:[%s172 + $0x678] sm:$0xff]
        %v414 = vld [vmem:[%s172 + $0x680] sm:$0xff]
        %v415 = vld [vmem:[%s172 + $0x688] sm:$0xff]
        %v416 = vld [vmem:[%s172 + $0x690] sm:$0xff]
        %v417 = vld [vmem:[%s172 + $0x698] sm:$0xff]
        %v418 = vld [vmem:[%s172 + $0x6a0] sm:$0xff]
        %v419 = vld [vmem:[%s172 + $0x6a8] sm:$0xff]
        %v420 = vld [vmem:[%s172 + $0x6b0] sm:$0xff]
        %v421 = vld [vmem:[%s172 + $0x6b8] sm:$0xff]
        %v422 = vld [vmem:[%s172 + $0x6c0] sm:$0xff]
        %v423 = vld [vmem:[%s172 + $0x6c8] sm:$0xff]
        %v424 = vld [vmem:[%s172 + $0x6d0] sm:$0xff]
        %v425 = vld [vmem:[%s172 + $0x6d8] sm:$0xff]
        %v426 = vld [vmem:[%s172 + $0x6e0] sm:$0xff]
        %v427 = vld [vmem:[%s172 + $0x6e8] sm:$0xff]
        %v428 = vld [vmem:[%s172 + $0x6f0] sm:$0xff]
        %v429 = vld [vmem:[%s172 + $0x6f8] sm:$0xff]
        %v430 = vld [vmem:[%s172 + $0x700] sm:$0xff]
        %v431 = vld [vmem:[%s172 + $0x708] sm:$0xff]
        %v432 = vld [vmem:[%s172 + $0x710] sm:$0xff]
        %v433 = vld [vmem:[%s172 + $0x718] sm:$0xff]
        %v434 = vld [vmem:[%s172 + $0x720] sm:$0xff]
        %v435 = vld [vmem:[%s172 + $0x728] sm:$0xff]
        %v436 = vld [vmem:[%s172 + $0x730] sm:$0xff]
        %v437 = vld [vmem:[%s172 + $0x738] sm:$0xff]
        %v438 = vld [vmem:[%s172 + $0x740] sm:$0xff]
        %v439 = vld [vmem:[%s172 + $0x748] sm:$0xff]
        %v440 = vld [vmem:[%s172 + $0x750] sm:$0xff]
        %v441 = vld [vmem:[%s172 + $0x758] sm:$0xff]
        %v442 = vld [vmem:[%s172 + $0x760] sm:$0xff]
        %v443 = vld [vmem:[%s172 + $0x768] sm:$0xff]
        %v444 = vld [vmem:[%s172 + $0x770] sm:$0xff]
        %v445 = vld [vmem:[%s172 + $0x778] sm:$0xff]
        %v446 = vld [vmem:[%s172 + $0x780] sm:$0xff]
        %v447 = vld [vmem:[%s172 + $0x788] sm:$0xff]
        %v448 = vld [vmem:[%s172 + $0x790] sm:$0xff]
        %v449 = vld [vmem:[%s172 + $0x798] sm:$0xff]
        %v450 = vld [vmem:[%s172 + $0x7a0] sm:$0xff]
        %v451 = vld [vmem:[%s172 + $0x7a8] sm:$0xff]
        %v452 = vld [vmem:[%s172 + $0x7b0] sm:$0xff]
        %v453 = vld [vmem:[%s172 + $0x7b8] sm:$0xff]
        %v454 = vld [vmem:[%s172 + $0x7c0] sm:$0xff]
        %v455 = vld [vmem:[%s172 + $0x7c8] sm:$0xff]
        %v456 = vld [vmem:[%s172 + $0x7d0] sm:$0xff]
        %v457 = vld [vmem:[%s172 + $0x7d8] sm:$0xff]
        %v458 = vld [vmem:[%s172 + $0x7e0] sm:$0xff]
        %v459 = vld [vmem:[%s172 + $0x7e8] sm:$0xff]
        %v460 = vld [vmem:[%s172 + $0x7f0] sm:$0xff]
        %v461 = vld [vmem:[%s172 + $0x7f8] sm:$0xff]
        %v462 = vld [vmem:[%s1] sm:$0xff]
        %v463 = vld [vmem:[%s1 + $0x8] sm:$0xff]
        %v464 = vld [vmem:[%s1 + $0x10] sm:$0xff]
        %v465 = vld [vmem:[%s1 + $0x18] sm:$0xff]
        %v466 = vld [vmem:[%s1 + $0x20] sm:$0xff]
        %v467 = vld [vmem:[%s1 + $0x28] sm:$0xff]
        %v468 = vld [vmem:[%s1 + $0x30] sm:$0xff]
        %v469 = vld [vmem:[%s1 + $0x38] sm:$0xff]
        %v470 = vld [vmem:[%s1 + $0x40] sm:$0xff]
        %v471 = vld [vmem:[%s1 + $0x48] sm:$0xff]
        %v472 = vld [vmem:[%s1 + $0x50] sm:$0xff]
        %v473 = vld [vmem:[%s1 + $0x58] sm:$0xff]
        %v474 = vld [vmem:[%s1 + $0x60] sm:$0xff]
        %v475 = vld [vmem:[%s1 + $0x68] sm:$0xff]
        %v476 = vld [vmem:[%s1 + $0x70] sm:$0xff]
        %v477 = vld [vmem:[%s1 + $0x78] sm:$0xff]
        %v478 = vld [vmem:[#allocation4] sm:$0x1]
        %v480 = vlaneseq
        %v481 = vshrl.u32 %v480, 7
        %v482 = vsub.s32 0, %v481
        %v483 = vrot.slane %v478, %v482
        %485 = vmatprep.subr.mxu0 0.0
        %486 = vmatpush1.msra.mxu0 %v477
        %487 = vmatprep.subr.mxu0 0.0
        %488 = vmatpush1.msra.mxu0 %v476
        %489 = vmatprep.subr.mxu0 0.0
        %490 = vmatpush1.msra.mxu0 %v475
        %491 = vmatprep.subr.mxu0 0.0
        %492 = vmatpush1.msra.mxu0 %v474
        %493 = vmatprep.subr.mxu0 0.0
        %494 = vmatpush1.msra.mxu0 %v473
        %495 = vmatprep.subr.mxu0 0.0
        %496 = vmatpush1.msra.mxu0 %v472
        %497 = vmatprep.subr.mxu0 0.0
        %498 = vmatpush1.msra.mxu0 %v471
        %499 = vmatprep.subr.mxu0 0.0
        %500 = vmatpush1.msra.mxu0 %v470
        %501 = vmatprep.subr.mxu0 0.0
        %502 = vmatpush1.msra.mxu0 %v469
        %503 = vmatprep.subr.mxu0 0.0
        %504 = vmatpush1.msra.mxu0 %v468
        %505 = vmatprep.subr.mxu0 0.0
        %506 = vmatpush1.msra.mxu0 %v467
        %507 = vmatprep.subr.mxu0 0.0
        %508 = vmatpush1.msra.mxu0 %v466
        %509 = vmatprep.subr.mxu0 0.0
        %510 = vmatpush1.msra.mxu0 %v465
        %511 = vmatprep.subr.mxu0 0.0
        %512 = vmatpush1.msra.mxu0 %v464
        %513 = vmatprep.subr.mxu0 0.0
        %514 = vmatpush1.msra.mxu0 %v463
        %515 = vmatprep.subr.mxu0 0.0
        %516 = vmatpush1.msra.mxu0 %v462
        %517 = vmatprep.subr.mxu0 0.0
        %518 = vmatpush2.msra.mxu0 0.0
        %519 = vmatprep.subr.mxu0 0.0
        %520 = vmatpush2.msra.mxu0 0.0
        %521 = vmatprep.subr.mxu0 0.0
        %522 = vmatpush2.msra.mxu0 0.0
        %523 = vmatprep.subr.mxu0 0.0
        %524 = vmatpush2.msra.mxu0 0.0
        %525 = vmatprep.subr.mxu0 0.0
        %526 = vmatpush2.msra.mxu0 0.0
        %527 = vmatprep.subr.mxu0 0.0
        %528 = vmatpush2.msra.mxu0 0.0
        %529 = vmatprep.subr.mxu0 0.0
        %530 = vmatpush2.msra.mxu0 0.0
        %531 = vmatprep.subr.mxu0 0.0
        %532 = vmatpush2.msra.mxu0 0.0
        %533 = vmatprep.subr.mxu0 0.0
        %534 = vmatpush2.msra.mxu0 0.0
        %535 = vmatprep.subr.mxu0 0.0
        %536 = vmatpush2.msra.mxu0 0.0
        %537 = vmatprep.subr.mxu0 0.0
        %538 = vmatpush2.msra.mxu0 0.0
        %539 = vmatprep.subr.mxu0 0.0
        %540 = vmatpush2.msra.mxu0 0.0
        %541 = vmatprep.subr.mxu0 0.0
        %542 = vmatpush2.msra.mxu0 0.0
        %543 = vmatprep.subr.mxu0 0.0
        %544 = vmatpush2.msra.mxu0 0.0
        %545 = vmatprep.subr.mxu0 0.0
        %546 = vmatpush2.msra.mxu0 0.0
        %547 = vmatprep.subr.mxu0 0.0
        %548 = vmatpush2.msra.mxu0 0.0
        %549 = vmatprep.mubr.f32.mxu0 0.0
        %550 = vmatmul.mubr.f32.gmra.mxu0 %v206
        %v551 = vpop.f32.mrf.mxu0
        %v552 = vadd.f32 %v483, %v551
        %v553 = vpop.f32.mrf.mxu0
        %554 = vmatprep.mubr.f32.mxu0 0.0
        %555 = vmatmul.mubr.f32.gmra.mxu0 %v207
        %v556 = vpop.f32.mrf.mxu0
        %v557 = vadd.f32 %v483, %v556
        %v558 = vpop.f32.mrf.mxu0
        %559 = vmatprep.mubr.f32.mxu0 0.0
        %560 = vmatmul.mubr.f32.gmra.mxu0 %v208
        %v561 = vpop.f32.mrf.mxu0
        %v562 = vadd.f32 %v483, %v561
        %v563 = vpop.f32.mrf.mxu0
        %564 = vmatprep.mubr.f32.mxu0 0.0
        %565 = vmatmul.mubr.f32.gmra.mxu0 %v209
        %v566 = vpop.f32.mrf.mxu0
        %v567 = vadd.f32 %v483, %v566
        %v568 = vpop.f32.mrf.mxu0
        %569 = vmatprep.mubr.f32.mxu0 0.0
        %570 = vmatmul.mubr.f32.gmra.mxu0 %v210
        %v571 = vpop.f32.mrf.mxu0
        %v572 = vadd.f32 %v483, %v571
        %v573 = vpop.f32.mrf.mxu0
        %574 = vmatprep.mubr.f32.mxu0 0.0
        %575 = vmatmul.mubr.f32.gmra.mxu0 %v211
        %v576 = vpop.f32.mrf.mxu0
        %v577 = vadd.f32 %v483, %v576
        %v578 = vpop.f32.mrf.mxu0
        %579 = vmatprep.mubr.f32.mxu0 0.0
        %580 = vmatmul.mubr.f32.gmra.mxu0 %v212
        %v581 = vpop.f32.mrf.mxu0
        %v582 = vadd.f32 %v483, %v581
        %v583 = vpop.f32.mrf.mxu0
        %584 = vmatprep.mubr.f32.mxu0 0.0
        %585 = vmatmul.mubr.f32.gmra.mxu0 %v213
        %v586 = vpop.f32.mrf.mxu0
        %v587 = vadd.f32 %v483, %v586
        %v588 = vpop.f32.mrf.mxu0
        %589 = vmatprep.mubr.f32.mxu0 0.0
        %590 = vmatmul.mubr.f32.gmra.mxu0 %v214
        %v591 = vpop.f32.mrf.mxu0
        %v592 = vadd.f32 %v483, %v591
        %v593 = vpop.f32.mrf.mxu0
        %594 = vmatprep.mubr.f32.mxu0 0.0
        %595 = vmatmul.mubr.f32.gmra.mxu0 %v215
        %v596 = vpop.f32.mrf.mxu0
        %v597 = vadd.f32 %v483, %v596
        %v598 = vpop.f32.mrf.mxu0
        %599 = vmatprep.mubr.f32.mxu0 0.0
        %600 = vmatmul.mubr.f32.gmra.mxu0 %v216
        %v601 = vpop.f32.mrf.mxu0
        %v602 = vadd.f32 %v483, %v601
        %v603 = vpop.f32.mrf.mxu0
        %604 = vmatprep.mubr.f32.mxu0 0.0
        %605 = vmatmul.mubr.f32.gmra.mxu0 %v217
        %v606 = vpop.f32.mrf.mxu0
        %v607 = vadd.f32 %v483, %v606
        %v608 = vpop.f32.mrf.mxu0
        %609 = vmatprep.mubr.f32.mxu0 0.0
        %610 = vmatmul.mubr.f32.gmra.mxu0 %v218
        %v611 = vpop.f32.mrf.mxu0
        %v612 = vadd.f32 %v483, %v611
        %v613 = vpop.f32.mrf.mxu0
        %614 = vmatprep.mubr.f32.mxu0 0.0
        %615 = vmatmul.mubr.f32.gmra.mxu0 %v219
        %v616 = vpop.f32.mrf.mxu0
        %v617 = vadd.f32 %v483, %v616
        %v618 = vpop.f32.mrf.mxu0
        %619 = vmatprep.mubr.f32.mxu0 0.0
        %620 = vmatmul.mubr.f32.gmra.mxu0 %v220
        %v621 = vpop.f32.mrf.mxu0
        %v622 = vadd.f32 %v483, %v621
        %v623 = vpop.f32.mrf.mxu0
        %624 = vmatprep.mubr.f32.mxu0 0.0
        %625 = vmatmul.mubr.f32.gmra.mxu0 %v221
        %v626 = vpop.f32.mrf.mxu0
        %v627 = vadd.f32 %v483, %v626
        %v628 = vpop.f32.mrf.mxu0
        %629 = vmatprep.mubr.f32.mxu0 0.0
        %630 = vmatmul.mubr.f32.gmra.mxu0 %v222
        %v631 = vpop.f32.mrf.mxu0
        %v632 = vadd.f32 %v483, %v631
        %v633 = vpop.f32.mrf.mxu0
        %634 = vmatprep.mubr.f32.mxu0 0.0
        %635 = vmatmul.mubr.f32.gmra.mxu0 %v223
        %v636 = vpop.f32.mrf.mxu0
        %v637 = vadd.f32 %v483, %v636
        %v638 = vpop.f32.mrf.mxu0
        %639 = vmatprep.mubr.f32.mxu0 0.0
        %640 = vmatmul.mubr.f32.gmra.mxu0 %v224
        %v641 = vpop.f32.mrf.mxu0
        %v642 = vadd.f32 %v483, %v641
        %v643 = vpop.f32.mrf.mxu0
        %644 = vmatprep.mubr.f32.mxu0 0.0
        %645 = vmatmul.mubr.f32.gmra.mxu0 %v225
        %v646 = vpop.f32.mrf.mxu0
        %v647 = vadd.f32 %v483, %v646
        %v648 = vpop.f32.mrf.mxu0
        %649 = vmatprep.mubr.f32.mxu0 0.0
        %650 = vmatmul.mubr.f32.gmra.mxu0 %v226
        %v651 = vpop.f32.mrf.mxu0
        %v652 = vadd.f32 %v483, %v651
        %v653 = vpop.f32.mrf.mxu0
        %654 = vmatprep.mubr.f32.mxu0 0.0
        %655 = vmatmul.mubr.f32.gmra.mxu0 %v227
        %v656 = vpop.f32.mrf.mxu0
        %v657 = vadd.f32 %v483, %v656
        %v658 = vpop.f32.mrf.mxu0
        %659 = vmatprep.mubr.f32.mxu0 0.0
        %660 = vmatmul.mubr.f32.gmra.mxu0 %v228
        %v661 = vpop.f32.mrf.mxu0
        %v662 = vadd.f32 %v483, %v661
        %v663 = vpop.f32.mrf.mxu0
        %664 = vmatprep.mubr.f32.mxu0 0.0
        %665 = vmatmul.mubr.f32.gmra.mxu0 %v229
        %v666 = vpop.f32.mrf.mxu0
        %v667 = vadd.f32 %v483, %v666
        %v668 = vpop.f32.mrf.mxu0
        %669 = vmatprep.mubr.f32.mxu0 0.0
        %670 = vmatmul.mubr.f32.gmra.mxu0 %v230
        %v671 = vpop.f32.mrf.mxu0
        %v672 = vadd.f32 %v483, %v671
        %v673 = vpop.f32.mrf.mxu0
        %674 = vmatprep.mubr.f32.mxu0 0.0
        %675 = vmatmul.mubr.f32.gmra.mxu0 %v231
        %v676 = vpop.f32.mrf.mxu0
        %v677 = vadd.f32 %v483, %v676
        %v678 = vpop.f32.mrf.mxu0
        %679 = vmatprep.mubr.f32.mxu0 0.0
        %680 = vmatmul.mubr.f32.gmra.mxu0 %v232
        %v681 = vpop.f32.mrf.mxu0
        %v682 = vadd.f32 %v483, %v681
        %v683 = vpop.f32.mrf.mxu0
        %684 = vmatprep.mubr.f32.mxu0 0.0
        %685 = vmatmul.mubr.f32.gmra.mxu0 %v233
        %v686 = vpop.f32.mrf.mxu0
        %v687 = vadd.f32 %v483, %v686
        %v688 = vpop.f32.mrf.mxu0
        %689 = vmatprep.mubr.f32.mxu0 0.0
        %690 = vmatmul.mubr.f32.gmra.mxu0 %v234
        %v691 = vpop.f32.mrf.mxu0
        %v692 = vadd.f32 %v483, %v691
        %v693 = vpop.f32.mrf.mxu0
        %694 = vmatprep.mubr.f32.mxu0 0.0
        %695 = vmatmul.mubr.f32.gmra.mxu0 %v235
        %v696 = vpop.f32.mrf.mxu0
        %v697 = vadd.f32 %v483, %v696
        %v698 = vpop.f32.mrf.mxu0
        %699 = vmatprep.mubr.f32.mxu0 0.0
        %700 = vmatmul.mubr.f32.gmra.mxu0 %v236
        %v701 = vpop.f32.mrf.mxu0
        %v702 = vadd.f32 %v483, %v701
        %v703 = vpop.f32.mrf.mxu0
        %704 = vmatprep.mubr.f32.mxu0 0.0
        %705 = vmatmul.mubr.f32.gmra.mxu0 %v237
        %v706 = vpop.f32.mrf.mxu0
        %v707 = vadd.f32 %v483, %v706
        %v708 = vpop.f32.mrf.mxu0
        %709 = vmatprep.mubr.f32.mxu0 0.0
        %710 = vmatmul.mubr.f32.gmra.mxu0 %v238
        %v711 = vpop.f32.mrf.mxu0
        %v712 = vadd.f32 %v483, %v711
        %v713 = vpop.f32.mrf.mxu0
        %714 = vmatprep.mubr.f32.mxu0 0.0
        %715 = vmatmul.mubr.f32.gmra.mxu0 %v239
        %v716 = vpop.f32.mrf.mxu0
        %v717 = vadd.f32 %v483, %v716
        %v718 = vpop.f32.mrf.mxu0
        %719 = vmatprep.mubr.f32.mxu0 0.0
        %720 = vmatmul.mubr.f32.gmra.mxu0 %v240
        %v721 = vpop.f32.mrf.mxu0
        %v722 = vadd.f32 %v483, %v721
        %v723 = vpop.f32.mrf.mxu0
        %724 = vmatprep.mubr.f32.mxu0 0.0
        %725 = vmatmul.mubr.f32.gmra.mxu0 %v241
        %v726 = vpop.f32.mrf.mxu0
        %v727 = vadd.f32 %v483, %v726
        %v728 = vpop.f32.mrf.mxu0
        %729 = vmatprep.mubr.f32.mxu0 0.0
        %730 = vmatmul.mubr.f32.gmra.mxu0 %v242
        %v731 = vpop.f32.mrf.mxu0
        %v732 = vadd.f32 %v483, %v731
        %v733 = vpop.f32.mrf.mxu0
        %734 = vmatprep.mubr.f32.mxu0 0.0
        %735 = vmatmul.mubr.f32.gmra.mxu0 %v243
        %v736 = vpop.f32.mrf.mxu0
        %v737 = vadd.f32 %v483, %v736
        %v738 = vpop.f32.mrf.mxu0
        %739 = vmatprep.mubr.f32.mxu0 0.0
        %740 = vmatmul.mubr.f32.gmra.mxu0 %v244
        %v741 = vpop.f32.mrf.mxu0
        %v742 = vadd.f32 %v483, %v741
        %v743 = vpop.f32.mrf.mxu0
        %744 = vmatprep.mubr.f32.mxu0 0.0
        %745 = vmatmul.mubr.f32.gmra.mxu0 %v245
        %v746 = vpop.f32.mrf.mxu0
        %v747 = vadd.f32 %v483, %v746
        %v748 = vpop.f32.mrf.mxu0
        %749 = vmatprep.mubr.f32.mxu0 0.0
        %750 = vmatmul.mubr.f32.gmra.mxu0 %v246
        %v751 = vpop.f32.mrf.mxu0
        %v752 = vadd.f32 %v483, %v751
        %v753 = vpop.f32.mrf.mxu0
        %754 = vmatprep.mubr.f32.mxu0 0.0
        %755 = vmatmul.mubr.f32.gmra.mxu0 %v247
        %v756 = vpop.f32.mrf.mxu0
        %v757 = vadd.f32 %v483, %v756
        %v758 = vpop.f32.mrf.mxu0
        %759 = vmatprep.mubr.f32.mxu0 0.0
        %760 = vmatmul.mubr.f32.gmra.mxu0 %v248
        %v761 = vpop.f32.mrf.mxu0
        %v762 = vadd.f32 %v483, %v761
        %v763 = vpop.f32.mrf.mxu0
        %764 = vmatprep.mubr.f32.mxu0 0.0
        %765 = vmatmul.mubr.f32.gmra.mxu0 %v249
        %v766 = vpop.f32.mrf.mxu0
        %v767 = vadd.f32 %v483, %v766
        %v768 = vpop.f32.mrf.mxu0
        %769 = vmatprep.mubr.f32.mxu0 0.0
        %770 = vmatmul.mubr.f32.gmra.mxu0 %v250
        %v771 = vpop.f32.mrf.mxu0
        %v772 = vadd.f32 %v483, %v771
        %v773 = vpop.f32.mrf.mxu0
        %774 = vmatprep.mubr.f32.mxu0 0.0
        %775 = vmatmul.mubr.f32.gmra.mxu0 %v251
        %v776 = vpop.f32.mrf.mxu0
        %v777 = vadd.f32 %v483, %v776
        %v778 = vpop.f32.mrf.mxu0
        %779 = vmatprep.mubr.f32.mxu0 0.0
        %780 = vmatmul.mubr.f32.gmra.mxu0 %v252
        %v781 = vpop.f32.mrf.mxu0
        %v782 = vadd.f32 %v483, %v781
        %v783 = vpop.f32.mrf.mxu0
        %784 = vmatprep.mubr.f32.mxu0 0.0
        %785 = vmatmul.mubr.f32.gmra.mxu0 %v253
        %v786 = vpop.f32.mrf.mxu0
        %v787 = vadd.f32 %v483, %v786
        %v788 = vpop.f32.mrf.mxu0
        %789 = vmatprep.mubr.f32.mxu0 0.0
        %790 = vmatmul.mubr.f32.gmra.mxu0 %v254
        %v791 = vpop.f32.mrf.mxu0
        %v792 = vadd.f32 %v483, %v791
        %v793 = vpop.f32.mrf.mxu0
        %794 = vmatprep.mubr.f32.mxu0 0.0
        %795 = vmatmul.mubr.f32.gmra.mxu0 %v255
        %v796 = vpop.f32.mrf.mxu0
        %v797 = vadd.f32 %v483, %v796
        %v798 = vpop.f32.mrf.mxu0
        %799 = vmatprep.mubr.f32.mxu0 0.0
        %800 = vmatmul.mubr.f32.gmra.mxu0 %v256
        %v801 = vpop.f32.mrf.mxu0
        %v802 = vadd.f32 %v483, %v801
        %v803 = vpop.f32.mrf.mxu0
        %804 = vmatprep.mubr.f32.mxu0 0.0
        %805 = vmatmul.mubr.f32.gmra.mxu0 %v257
        %v806 = vpop.f32.mrf.mxu0
        %v807 = vadd.f32 %v483, %v806
        %v808 = vpop.f32.mrf.mxu0
        %809 = vmatprep.mubr.f32.mxu0 0.0
        %810 = vmatmul.mubr.f32.gmra.mxu0 %v258
        %v811 = vpop.f32.mrf.mxu0
        %v812 = vadd.f32 %v483, %v811
        %v813 = vpop.f32.mrf.mxu0
        %814 = vmatprep.mubr.f32.mxu0 0.0
        %815 = vmatmul.mubr.f32.gmra.mxu0 %v259
        %v816 = vpop.f32.mrf.mxu0
        %v817 = vadd.f32 %v483, %v816
        %v818 = vpop.f32.mrf.mxu0
        %819 = vmatprep.mubr.f32.mxu0 0.0
        %820 = vmatmul.mubr.f32.gmra.mxu0 %v260
        %v821 = vpop.f32.mrf.mxu0
        %v822 = vadd.f32 %v483, %v821
        %v823 = vpop.f32.mrf.mxu0
        %824 = vmatprep.mubr.f32.mxu0 0.0
        %825 = vmatmul.mubr.f32.gmra.mxu0 %v261
        %v826 = vpop.f32.mrf.mxu0
        %v827 = vadd.f32 %v483, %v826
        %v828 = vpop.f32.mrf.mxu0
        %829 = vmatprep.mubr.f32.mxu0 0.0
        %830 = vmatmul.mubr.f32.gmra.mxu0 %v262
        %v831 = vpop.f32.mrf.mxu0
        %v832 = vadd.f32 %v483, %v831
        %v833 = vpop.f32.mrf.mxu0
        %834 = vmatprep.mubr.f32.mxu0 0.0
        %835 = vmatmul.mubr.f32.gmra.mxu0 %v263
        %v836 = vpop.f32.mrf.mxu0
        %v837 = vadd.f32 %v483, %v836
        %v838 = vpop.f32.mrf.mxu0
        %839 = vmatprep.mubr.f32.mxu0 0.0
        %840 = vmatmul.mubr.f32.gmra.mxu0 %v264
        %v841 = vpop.f32.mrf.mxu0
        %v842 = vadd.f32 %v483, %v841
        %v843 = vpop.f32.mrf.mxu0
        %844 = vmatprep.mubr.f32.mxu0 0.0
        %845 = vmatmul.mubr.f32.gmra.mxu0 %v265
        %v846 = vpop.f32.mrf.mxu0
        %v847 = vadd.f32 %v483, %v846
        %v848 = vpop.f32.mrf.mxu0
        %849 = vmatprep.mubr.f32.mxu0 0.0
        %850 = vmatmul.mubr.f32.gmra.mxu0 %v266
        %v851 = vpop.f32.mrf.mxu0
        %v852 = vadd.f32 %v483, %v851
        %v853 = vpop.f32.mrf.mxu0
        %854 = vmatprep.mubr.f32.mxu0 0.0
        %855 = vmatmul.mubr.f32.gmra.mxu0 %v267
        %v856 = vpop.f32.mrf.mxu0
        %v857 = vadd.f32 %v483, %v856
        %v858 = vpop.f32.mrf.mxu0
        %859 = vmatprep.mubr.f32.mxu0 0.0
        %860 = vmatmul.mubr.f32.gmra.mxu0 %v268
        %v861 = vpop.f32.mrf.mxu0
        %v862 = vadd.f32 %v483, %v861
        %v863 = vpop.f32.mrf.mxu0
        %864 = vmatprep.mubr.f32.mxu0 0.0
        %865 = vmatmul.mubr.f32.gmra.mxu0 %v269
        %v866 = vpop.f32.mrf.mxu0
        %v867 = vadd.f32 %v483, %v866
        %v868 = vpop.f32.mrf.mxu0
        %869 = vmatprep.mubr.f32.mxu0 0.0
        %870 = vmatmul.mubr.f32.gmra.mxu0 %v270
        %v871 = vpop.f32.mrf.mxu0
        %v872 = vadd.f32 %v483, %v871
        %v873 = vpop.f32.mrf.mxu0
        %874 = vmatprep.mubr.f32.mxu0 0.0
        %875 = vmatmul.mubr.f32.gmra.mxu0 %v271
        %v876 = vpop.f32.mrf.mxu0
        %v877 = vadd.f32 %v483, %v876
        %v878 = vpop.f32.mrf.mxu0
        %879 = vmatprep.mubr.f32.mxu0 0.0
        %880 = vmatmul.mubr.f32.gmra.mxu0 %v272
        %v881 = vpop.f32.mrf.mxu0
        %v882 = vadd.f32 %v483, %v881
        %v883 = vpop.f32.mrf.mxu0
        %884 = vmatprep.mubr.f32.mxu0 0.0
        %885 = vmatmul.mubr.f32.gmra.mxu0 %v273
        %v886 = vpop.f32.mrf.mxu0
        %v887 = vadd.f32 %v483, %v886
        %v888 = vpop.f32.mrf.mxu0
        %889 = vmatprep.mubr.f32.mxu0 0.0
        %890 = vmatmul.mubr.f32.gmra.mxu0 %v274
        %v891 = vpop.f32.mrf.mxu0
        %v892 = vadd.f32 %v483, %v891
        %v893 = vpop.f32.mrf.mxu0
        %894 = vmatprep.mubr.f32.mxu0 0.0
        %895 = vmatmul.mubr.f32.gmra.mxu0 %v275
        %v896 = vpop.f32.mrf.mxu0
        %v897 = vadd.f32 %v483, %v896
        %v898 = vpop.f32.mrf.mxu0
        %899 = vmatprep.mubr.f32.mxu0 0.0
        %900 = vmatmul.mubr.f32.gmra.mxu0 %v276
        %v901 = vpop.f32.mrf.mxu0
        %v902 = vadd.f32 %v483, %v901
        %v903 = vpop.f32.mrf.mxu0
        %904 = vmatprep.mubr.f32.mxu0 0.0
        %905 = vmatmul.mubr.f32.gmra.mxu0 %v277
        %v906 = vpop.f32.mrf.mxu0
        %v907 = vadd.f32 %v483, %v906
        %v908 = vpop.f32.mrf.mxu0
        %909 = vmatprep.mubr.f32.mxu0 0.0
        %910 = vmatmul.mubr.f32.gmra.mxu0 %v278
        %v911 = vpop.f32.mrf.mxu0
        %v912 = vadd.f32 %v483, %v911
        %v913 = vpop.f32.mrf.mxu0
        %914 = vmatprep.mubr.f32.mxu0 0.0
        %915 = vmatmul.mubr.f32.gmra.mxu0 %v279
        %v916 = vpop.f32.mrf.mxu0
        %v917 = vadd.f32 %v483, %v916
        %v918 = vpop.f32.mrf.mxu0
        %919 = vmatprep.mubr.f32.mxu0 0.0
        %920 = vmatmul.mubr.f32.gmra.mxu0 %v280
        %v921 = vpop.f32.mrf.mxu0
        %v922 = vadd.f32 %v483, %v921
        %v923 = vpop.f32.mrf.mxu0
        %924 = vmatprep.mubr.f32.mxu0 0.0
        %925 = vmatmul.mubr.f32.gmra.mxu0 %v281
        %v926 = vpop.f32.mrf.mxu0
        %v927 = vadd.f32 %v483, %v926
        %v928 = vpop.f32.mrf.mxu0
        %929 = vmatprep.mubr.f32.mxu0 0.0
        %930 = vmatmul.mubr.f32.gmra.mxu0 %v282
        %v931 = vpop.f32.mrf.mxu0
        %v932 = vadd.f32 %v483, %v931
        %v933 = vpop.f32.mrf.mxu0
        %934 = vmatprep.mubr.f32.mxu0 0.0
        %935 = vmatmul.mubr.f32.gmra.mxu0 %v283
        %v936 = vpop.f32.mrf.mxu0
        %v937 = vadd.f32 %v483, %v936
        %v938 = vpop.f32.mrf.mxu0
        %939 = vmatprep.mubr.f32.mxu0 0.0
        %940 = vmatmul.mubr.f32.gmra.mxu0 %v284
        %v941 = vpop.f32.mrf.mxu0
        %v942 = vadd.f32 %v483, %v941
        %v943 = vpop.f32.mrf.mxu0
        %944 = vmatprep.mubr.f32.mxu0 0.0
        %945 = vmatmul.mubr.f32.gmra.mxu0 %v285
        %v946 = vpop.f32.mrf.mxu0
        %v947 = vadd.f32 %v483, %v946
        %v948 = vpop.f32.mrf.mxu0
        %949 = vmatprep.mubr.f32.mxu0 0.0
        %950 = vmatmul.mubr.f32.gmra.mxu0 %v286
        %v951 = vpop.f32.mrf.mxu0
        %v952 = vadd.f32 %v483, %v951
        %v953 = vpop.f32.mrf.mxu0
        %954 = vmatprep.mubr.f32.mxu0 0.0
        %955 = vmatmul.mubr.f32.gmra.mxu0 %v287
        %v956 = vpop.f32.mrf.mxu0
        %v957 = vadd.f32 %v483, %v956
        %v958 = vpop.f32.mrf.mxu0
        %959 = vmatprep.mubr.f32.mxu0 0.0
        %960 = vmatmul.mubr.f32.gmra.mxu0 %v288
        %v961 = vpop.f32.mrf.mxu0
        %v962 = vadd.f32 %v483, %v961
        %v963 = vpop.f32.mrf.mxu0
        %964 = vmatprep.mubr.f32.mxu0 0.0
        %965 = vmatmul.mubr.f32.gmra.mxu0 %v289
        %v966 = vpop.f32.mrf.mxu0
        %v967 = vadd.f32 %v483, %v966
        %v968 = vpop.f32.mrf.mxu0
        %969 = vmatprep.mubr.f32.mxu0 0.0
        %970 = vmatmul.mubr.f32.gmra.mxu0 %v290
        %v971 = vpop.f32.mrf.mxu0
        %v972 = vadd.f32 %v483, %v971
        %v973 = vpop.f32.mrf.mxu0
        %974 = vmatprep.mubr.f32.mxu0 0.0
        %975 = vmatmul.mubr.f32.gmra.mxu0 %v291
        %v976 = vpop.f32.mrf.mxu0
        %v977 = vadd.f32 %v483, %v976
        %v978 = vpop.f32.mrf.mxu0
        %979 = vmatprep.mubr.f32.mxu0 0.0
        %980 = vmatmul.mubr.f32.gmra.mxu0 %v292
        %v981 = vpop.f32.mrf.mxu0
        %v982 = vadd.f32 %v483, %v981
        %v983 = vpop.f32.mrf.mxu0
        %984 = vmatprep.mubr.f32.mxu0 0.0
        %985 = vmatmul.mubr.f32.gmra.mxu0 %v293
        %v986 = vpop.f32.mrf.mxu0
        %v987 = vadd.f32 %v483, %v986
        %v988 = vpop.f32.mrf.mxu0
        %989 = vmatprep.mubr.f32.mxu0 0.0
        %990 = vmatmul.mubr.f32.gmra.mxu0 %v294
        %v991 = vpop.f32.mrf.mxu0
        %v992 = vadd.f32 %v483, %v991
        %v993 = vpop.f32.mrf.mxu0
        %994 = vmatprep.mubr.f32.mxu0 0.0
        %995 = vmatmul.mubr.f32.gmra.mxu0 %v295
        %v996 = vpop.f32.mrf.mxu0
        %v997 = vadd.f32 %v483, %v996
        %v998 = vpop.f32.mrf.mxu0
        %999 = vmatprep.mubr.f32.mxu0 0.0
        %1000 = vmatmul.mubr.f32.gmra.mxu0 %v296
        %v1001 = vpop.f32.mrf.mxu0
        %v1002 = vadd.f32 %v483, %v1001
        %v1003 = vpop.f32.mrf.mxu0
        %1004 = vmatprep.mubr.f32.mxu0 0.0
        %1005 = vmatmul.mubr.f32.gmra.mxu0 %v297
        %v1006 = vpop.f32.mrf.mxu0
        %v1007 = vadd.f32 %v483, %v1006
        %v1008 = vpop.f32.mrf.mxu0
        %1009 = vmatprep.mubr.f32.mxu0 0.0
        %1010 = vmatmul.mubr.f32.gmra.mxu0 %v298
        %v1011 = vpop.f32.mrf.mxu0
        %v1012 = vadd.f32 %v483, %v1011
        %v1013 = vpop.f32.mrf.mxu0
        %1014 = vmatprep.mubr.f32.mxu0 0.0
        %1015 = vmatmul.mubr.f32.gmra.mxu0 %v299
        %v1016 = vpop.f32.mrf.mxu0
        %v1017 = vadd.f32 %v483, %v1016
        %v1018 = vpop.f32.mrf.mxu0
        %1019 = vmatprep.mubr.f32.mxu0 0.0
        %1020 = vmatmul.mubr.f32.gmra.mxu0 %v300
        %v1021 = vpop.f32.mrf.mxu0
        %v1022 = vadd.f32 %v483, %v1021
        %v1023 = vpop.f32.mrf.mxu0
        %1024 = vmatprep.mubr.f32.mxu0 0.0
        %1025 = vmatmul.mubr.f32.gmra.mxu0 %v301
        %v1026 = vpop.f32.mrf.mxu0
        %v1027 = vadd.f32 %v483, %v1026
        %v1028 = vpop.f32.mrf.mxu0
        %1029 = vmatprep.mubr.f32.mxu0 0.0
        %1030 = vmatmul.mubr.f32.gmra.mxu0 %v302
        %v1031 = vpop.f32.mrf.mxu0
        %v1032 = vadd.f32 %v483, %v1031
        %v1033 = vpop.f32.mrf.mxu0
        %1034 = vmatprep.mubr.f32.mxu0 0.0
        %1035 = vmatmul.mubr.f32.gmra.mxu0 %v303
        %v1036 = vpop.f32.mrf.mxu0
        %v1037 = vadd.f32 %v483, %v1036
        %v1038 = vpop.f32.mrf.mxu0
        %1039 = vmatprep.mubr.f32.mxu0 0.0
        %1040 = vmatmul.mubr.f32.gmra.mxu0 %v304
        %v1041 = vpop.f32.mrf.mxu0
        %v1042 = vadd.f32 %v483, %v1041
        %v1043 = vpop.f32.mrf.mxu0
        %1044 = vmatprep.mubr.f32.mxu0 0.0
        %1045 = vmatmul.mubr.f32.gmra.mxu0 %v305
        %v1046 = vpop.f32.mrf.mxu0
        %v1047 = vadd.f32 %v483, %v1046
        %v1048 = vpop.f32.mrf.mxu0
        %1049 = vmatprep.mubr.f32.mxu0 0.0
        %1050 = vmatmul.mubr.f32.gmra.mxu0 %v306
        %v1051 = vpop.f32.mrf.mxu0
        %v1052 = vadd.f32 %v483, %v1051
        %v1053 = vpop.f32.mrf.mxu0
        %1054 = vmatprep.mubr.f32.mxu0 0.0
        %1055 = vmatmul.mubr.f32.gmra.mxu0 %v307
        %v1056 = vpop.f32.mrf.mxu0
        %v1057 = vadd.f32 %v483, %v1056
        %v1058 = vpop.f32.mrf.mxu0
        %1059 = vmatprep.mubr.f32.mxu0 0.0
        %1060 = vmatmul.mubr.f32.gmra.mxu0 %v308
        %v1061 = vpop.f32.mrf.mxu0
        %v1062 = vadd.f32 %v483, %v1061
        %v1063 = vpop.f32.mrf.mxu0
        %1064 = vmatprep.mubr.f32.mxu0 0.0
        %1065 = vmatmul.mubr.f32.gmra.mxu0 %v309
        %v1066 = vpop.f32.mrf.mxu0
        %v1067 = vadd.f32 %v483, %v1066
        %v1068 = vpop.f32.mrf.mxu0
        %1069 = vmatprep.mubr.f32.mxu0 0.0
        %1070 = vmatmul.mubr.f32.gmra.mxu0 %v310
        %v1071 = vpop.f32.mrf.mxu0
        %v1072 = vadd.f32 %v483, %v1071
        %v1073 = vpop.f32.mrf.mxu0
        %1074 = vmatprep.mubr.f32.mxu0 0.0
        %1075 = vmatmul.mubr.f32.gmra.mxu0 %v311
        %v1076 = vpop.f32.mrf.mxu0
        %v1077 = vadd.f32 %v483, %v1076
        %v1078 = vpop.f32.mrf.mxu0
        %1079 = vmatprep.mubr.f32.mxu0 0.0
        %1080 = vmatmul.mubr.f32.gmra.mxu0 %v312
        %v1081 = vpop.f32.mrf.mxu0
        %v1082 = vadd.f32 %v483, %v1081
        %v1083 = vpop.f32.mrf.mxu0
        %1084 = vmatprep.mubr.f32.mxu0 0.0
        %1085 = vmatmul.mubr.f32.gmra.mxu0 %v313
        %v1086 = vpop.f32.mrf.mxu0
        %v1087 = vadd.f32 %v483, %v1086
        %v1088 = vpop.f32.mrf.mxu0
        %1089 = vmatprep.mubr.f32.mxu0 0.0
        %1090 = vmatmul.mubr.f32.gmra.mxu0 %v314
        %v1091 = vpop.f32.mrf.mxu0
        %v1092 = vadd.f32 %v483, %v1091
        %v1093 = vpop.f32.mrf.mxu0
        %1094 = vmatprep.mubr.f32.mxu0 0.0
        %1095 = vmatmul.mubr.f32.gmra.mxu0 %v315
        %v1096 = vpop.f32.mrf.mxu0
        %v1097 = vadd.f32 %v483, %v1096
        %v1098 = vpop.f32.mrf.mxu0
        %1099 = vmatprep.mubr.f32.mxu0 0.0
        %1100 = vmatmul.mubr.f32.gmra.mxu0 %v316
        %v1101 = vpop.f32.mrf.mxu0
        %v1102 = vadd.f32 %v483, %v1101
        %v1103 = vpop.f32.mrf.mxu0
        %1104 = vmatprep.mubr.f32.mxu0 0.0
        %1105 = vmatmul.mubr.f32.gmra.mxu0 %v317
        %v1106 = vpop.f32.mrf.mxu0
        %v1107 = vadd.f32 %v483, %v1106
        %v1108 = vpop.f32.mrf.mxu0
        %1109 = vmatprep.mubr.f32.mxu0 0.0
        %1110 = vmatmul.mubr.f32.gmra.mxu0 %v318
        %v1111 = vpop.f32.mrf.mxu0
        %v1112 = vadd.f32 %v483, %v1111
        %v1113 = vpop.f32.mrf.mxu0
        %1114 = vmatprep.mubr.f32.mxu0 0.0
        %1115 = vmatmul.mubr.f32.gmra.mxu0 %v319
        %v1116 = vpop.f32.mrf.mxu0
        %v1117 = vadd.f32 %v483, %v1116
        %v1118 = vpop.f32.mrf.mxu0
        %1119 = vmatprep.mubr.f32.mxu0 0.0
        %1120 = vmatmul.mubr.f32.gmra.mxu0 %v320
        %v1121 = vpop.f32.mrf.mxu0
        %v1122 = vadd.f32 %v483, %v1121
        %v1123 = vpop.f32.mrf.mxu0
        %1124 = vmatprep.mubr.f32.mxu0 0.0
        %1125 = vmatmul.mubr.f32.gmra.mxu0 %v321
        %v1126 = vpop.f32.mrf.mxu0
        %v1127 = vadd.f32 %v483, %v1126
        %v1128 = vpop.f32.mrf.mxu0
        %1129 = vmatprep.mubr.f32.mxu0 0.0
        %1130 = vmatmul.mubr.f32.gmra.mxu0 %v322
        %v1131 = vpop.f32.mrf.mxu0
        %v1132 = vadd.f32 %v483, %v1131
        %v1133 = vpop.f32.mrf.mxu0
        %1134 = vmatprep.mubr.f32.mxu0 0.0
        %1135 = vmatmul.mubr.f32.gmra.mxu0 %v323
        %v1136 = vpop.f32.mrf.mxu0
        %v1137 = vadd.f32 %v483, %v1136
        %v1138 = vpop.f32.mrf.mxu0
        %1139 = vmatprep.mubr.f32.mxu0 0.0
        %1140 = vmatmul.mubr.f32.gmra.mxu0 %v324
        %v1141 = vpop.f32.mrf.mxu0
        %v1142 = vadd.f32 %v483, %v1141
        %v1143 = vpop.f32.mrf.mxu0
        %1144 = vmatprep.mubr.f32.mxu0 0.0
        %1145 = vmatmul.mubr.f32.gmra.mxu0 %v325
        %v1146 = vpop.f32.mrf.mxu0
        %v1147 = vadd.f32 %v483, %v1146
        %v1148 = vpop.f32.mrf.mxu0
        %1149 = vmatprep.mubr.f32.mxu0 0.0
        %1150 = vmatmul.mubr.f32.gmra.mxu0 %v326
        %v1151 = vpop.f32.mrf.mxu0
        %v1152 = vadd.f32 %v483, %v1151
        %v1153 = vpop.f32.mrf.mxu0
        %1154 = vmatprep.mubr.f32.mxu0 0.0
        %1155 = vmatmul.mubr.f32.gmra.mxu0 %v327
        %v1156 = vpop.f32.mrf.mxu0
        %v1157 = vadd.f32 %v483, %v1156
        %v1158 = vpop.f32.mrf.mxu0
        %1159 = vmatprep.mubr.f32.mxu0 0.0
        %1160 = vmatmul.mubr.f32.gmra.mxu0 %v328
        %v1161 = vpop.f32.mrf.mxu0
        %v1162 = vadd.f32 %v483, %v1161
        %v1163 = vpop.f32.mrf.mxu0
        %1164 = vmatprep.mubr.f32.mxu0 0.0
        %1165 = vmatmul.mubr.f32.gmra.mxu0 %v329
        %v1166 = vpop.f32.mrf.mxu0
        %v1167 = vadd.f32 %v483, %v1166
        %v1168 = vpop.f32.mrf.mxu0
        %1169 = vmatprep.mubr.f32.mxu0 0.0
        %1170 = vmatmul.mubr.f32.gmra.mxu0 %v330
        %v1171 = vpop.f32.mrf.mxu0
        %v1172 = vadd.f32 %v483, %v1171
        %v1173 = vpop.f32.mrf.mxu0
        %1174 = vmatprep.mubr.f32.mxu0 0.0
        %1175 = vmatmul.mubr.f32.gmra.mxu0 %v331
        %v1176 = vpop.f32.mrf.mxu0
        %v1177 = vadd.f32 %v483, %v1176
        %v1178 = vpop.f32.mrf.mxu0
        %1179 = vmatprep.mubr.f32.mxu0 0.0
        %1180 = vmatmul.mubr.f32.gmra.mxu0 %v332
        %v1181 = vpop.f32.mrf.mxu0
        %v1182 = vadd.f32 %v483, %v1181
        %v1183 = vpop.f32.mrf.mxu0
        %1184 = vmatprep.mubr.f32.mxu0 0.0
        %1185 = vmatmul.mubr.f32.gmra.mxu0 %v333
        %v1186 = vpop.f32.mrf.mxu0
        %v1187 = vadd.f32 %v483, %v1186
        %v1188 = vpop.f32.mrf.mxu0
        %1189 = vmatprep.mubr.f32.mxu0 0.0
        %1190 = vmatmul.mubr.f32.gmra.mxu0 %v334
        %v1191 = vpop.f32.mrf.mxu0
        %v1192 = vadd.f32 %v483, %v1191
        %v1193 = vpop.f32.mrf.mxu0
        %1194 = vmatprep.mubr.f32.mxu0 0.0
        %1195 = vmatmul.mubr.f32.gmra.mxu0 %v335
        %v1196 = vpop.f32.mrf.mxu0
        %v1197 = vadd.f32 %v483, %v1196
        %v1198 = vpop.f32.mrf.mxu0
        %1199 = vmatprep.mubr.f32.mxu0 0.0
        %1200 = vmatmul.mubr.f32.gmra.mxu0 %v336
        %v1201 = vpop.f32.mrf.mxu0
        %v1202 = vadd.f32 %v483, %v1201
        %v1203 = vpop.f32.mrf.mxu0
        %1204 = vmatprep.mubr.f32.mxu0 0.0
        %1205 = vmatmul.mubr.f32.gmra.mxu0 %v337
        %v1206 = vpop.f32.mrf.mxu0
        %v1207 = vadd.f32 %v483, %v1206
        %v1208 = vpop.f32.mrf.mxu0
        %1209 = vmatprep.mubr.f32.mxu0 0.0
        %1210 = vmatmul.mubr.f32.gmra.mxu0 %v338
        %v1211 = vpop.f32.mrf.mxu0
        %v1212 = vadd.f32 %v483, %v1211
        %v1213 = vpop.f32.mrf.mxu0
        %1214 = vmatprep.mubr.f32.mxu0 0.0
        %1215 = vmatmul.mubr.f32.gmra.mxu0 %v339
        %v1216 = vpop.f32.mrf.mxu0
        %v1217 = vadd.f32 %v483, %v1216
        %v1218 = vpop.f32.mrf.mxu0
        %1219 = vmatprep.mubr.f32.mxu0 0.0
        %1220 = vmatmul.mubr.f32.gmra.mxu0 %v340
        %v1221 = vpop.f32.mrf.mxu0
        %v1222 = vadd.f32 %v483, %v1221
        %v1223 = vpop.f32.mrf.mxu0
        %1224 = vmatprep.mubr.f32.mxu0 0.0
        %1225 = vmatmul.mubr.f32.gmra.mxu0 %v341
        %v1226 = vpop.f32.mrf.mxu0
        %v1227 = vadd.f32 %v483, %v1226
        %v1228 = vpop.f32.mrf.mxu0
        %1229 = vmatprep.mubr.f32.mxu0 0.0
        %1230 = vmatmul.mubr.f32.gmra.mxu0 %v342
        %v1231 = vpop.f32.mrf.mxu0
        %v1232 = vadd.f32 %v483, %v1231
        %v1233 = vpop.f32.mrf.mxu0
        %1234 = vmatprep.mubr.f32.mxu0 0.0
        %1235 = vmatmul.mubr.f32.gmra.mxu0 %v343
        %v1236 = vpop.f32.mrf.mxu0
        %v1237 = vadd.f32 %v483, %v1236
        %v1238 = vpop.f32.mrf.mxu0
        %1239 = vmatprep.mubr.f32.mxu0 0.0
        %1240 = vmatmul.mubr.f32.gmra.mxu0 %v344
        %v1241 = vpop.f32.mrf.mxu0
        %v1242 = vadd.f32 %v483, %v1241
        %v1243 = vpop.f32.mrf.mxu0
        %1244 = vmatprep.mubr.f32.mxu0 0.0
        %1245 = vmatmul.mubr.f32.gmra.mxu0 %v345
        %v1246 = vpop.f32.mrf.mxu0
        %v1247 = vadd.f32 %v483, %v1246
        %v1248 = vpop.f32.mrf.mxu0
        %1249 = vmatprep.mubr.f32.mxu0 0.0
        %1250 = vmatmul.mubr.f32.gmra.mxu0 %v346
        %v1251 = vpop.f32.mrf.mxu0
        %v1252 = vadd.f32 %v483, %v1251
        %v1253 = vpop.f32.mrf.mxu0
        %1254 = vmatprep.mubr.f32.mxu0 0.0
        %1255 = vmatmul.mubr.f32.gmra.mxu0 %v347
        %v1256 = vpop.f32.mrf.mxu0
        %v1257 = vadd.f32 %v483, %v1256
        %v1258 = vpop.f32.mrf.mxu0
        %1259 = vmatprep.mubr.f32.mxu0 0.0
        %1260 = vmatmul.mubr.f32.gmra.mxu0 %v348
        %v1261 = vpop.f32.mrf.mxu0
        %v1262 = vadd.f32 %v483, %v1261
        %v1263 = vpop.f32.mrf.mxu0
        %1264 = vmatprep.mubr.f32.mxu0 0.0
        %1265 = vmatmul.mubr.f32.gmra.mxu0 %v349
        %v1266 = vpop.f32.mrf.mxu0
        %v1267 = vadd.f32 %v483, %v1266
        %v1268 = vpop.f32.mrf.mxu0
        %1269 = vmatprep.mubr.f32.mxu0 0.0
        %1270 = vmatmul.mubr.f32.gmra.mxu0 %v350
        %v1271 = vpop.f32.mrf.mxu0
        %v1272 = vadd.f32 %v483, %v1271
        %v1273 = vpop.f32.mrf.mxu0
        %1274 = vmatprep.mubr.f32.mxu0 0.0
        %1275 = vmatmul.mubr.f32.gmra.mxu0 %v351
        %v1276 = vpop.f32.mrf.mxu0
        %v1277 = vadd.f32 %v483, %v1276
        %v1278 = vpop.f32.mrf.mxu0
        %1279 = vmatprep.mubr.f32.mxu0 0.0
        %1280 = vmatmul.mubr.f32.gmra.mxu0 %v352
        %v1281 = vpop.f32.mrf.mxu0
        %v1282 = vadd.f32 %v483, %v1281
        %v1283 = vpop.f32.mrf.mxu0
        %1284 = vmatprep.mubr.f32.mxu0 0.0
        %1285 = vmatmul.mubr.f32.gmra.mxu0 %v353
        %v1286 = vpop.f32.mrf.mxu0
        %v1287 = vadd.f32 %v483, %v1286
        %v1288 = vpop.f32.mrf.mxu0
        %1289 = vmatprep.mubr.f32.mxu0 0.0
        %1290 = vmatmul.mubr.f32.gmra.mxu0 %v354
        %v1291 = vpop.f32.mrf.mxu0
        %v1292 = vadd.f32 %v483, %v1291
        %v1293 = vpop.f32.mrf.mxu0
        %1294 = vmatprep.mubr.f32.mxu0 0.0
        %1295 = vmatmul.mubr.f32.gmra.mxu0 %v355
        %v1296 = vpop.f32.mrf.mxu0
        %v1297 = vadd.f32 %v483, %v1296
        %v1298 = vpop.f32.mrf.mxu0
        %1299 = vmatprep.mubr.f32.mxu0 0.0
        %1300 = vmatmul.mubr.f32.gmra.mxu0 %v356
        %v1301 = vpop.f32.mrf.mxu0
        %v1302 = vadd.f32 %v483, %v1301
        %v1303 = vpop.f32.mrf.mxu0
        %1304 = vmatprep.mubr.f32.mxu0 0.0
        %1305 = vmatmul.mubr.f32.gmra.mxu0 %v357
        %v1306 = vpop.f32.mrf.mxu0
        %v1307 = vadd.f32 %v483, %v1306
        %v1308 = vpop.f32.mrf.mxu0
        %1309 = vmatprep.mubr.f32.mxu0 0.0
        %1310 = vmatmul.mubr.f32.gmra.mxu0 %v358
        %v1311 = vpop.f32.mrf.mxu0
        %v1312 = vadd.f32 %v483, %v1311
        %v1313 = vpop.f32.mrf.mxu0
        %1314 = vmatprep.mubr.f32.mxu0 0.0
        %1315 = vmatmul.mubr.f32.gmra.mxu0 %v359
        %v1316 = vpop.f32.mrf.mxu0
        %v1317 = vadd.f32 %v483, %v1316
        %v1318 = vpop.f32.mrf.mxu0
        %1319 = vmatprep.mubr.f32.mxu0 0.0
        %1320 = vmatmul.mubr.f32.gmra.mxu0 %v360
        %v1321 = vpop.f32.mrf.mxu0
        %v1322 = vadd.f32 %v483, %v1321
        %v1323 = vpop.f32.mrf.mxu0
        %1324 = vmatprep.mubr.f32.mxu0 0.0
        %1325 = vmatmul.mubr.f32.gmra.mxu0 %v361
        %v1326 = vpop.f32.mrf.mxu0
        %v1327 = vadd.f32 %v483, %v1326
        %v1328 = vpop.f32.mrf.mxu0
        %1329 = vmatprep.mubr.f32.mxu0 0.0
        %1330 = vmatmul.mubr.f32.gmra.mxu0 %v362
        %v1331 = vpop.f32.mrf.mxu0
        %v1332 = vadd.f32 %v483, %v1331
        %v1333 = vpop.f32.mrf.mxu0
        %1334 = vmatprep.mubr.f32.mxu0 0.0
        %1335 = vmatmul.mubr.f32.gmra.mxu0 %v363
        %v1336 = vpop.f32.mrf.mxu0
        %v1337 = vadd.f32 %v483, %v1336
        %v1338 = vpop.f32.mrf.mxu0
        %1339 = vmatprep.mubr.f32.mxu0 0.0
        %1340 = vmatmul.mubr.f32.gmra.mxu0 %v364
        %v1341 = vpop.f32.mrf.mxu0
        %v1342 = vadd.f32 %v483, %v1341
        %v1343 = vpop.f32.mrf.mxu0
        %1344 = vmatprep.mubr.f32.mxu0 0.0
        %1345 = vmatmul.mubr.f32.gmra.mxu0 %v365
        %v1346 = vpop.f32.mrf.mxu0
        %v1347 = vadd.f32 %v483, %v1346
        %v1348 = vpop.f32.mrf.mxu0
        %1349 = vmatprep.mubr.f32.mxu0 0.0
        %1350 = vmatmul.mubr.f32.gmra.mxu0 %v366
        %v1351 = vpop.f32.mrf.mxu0
        %v1352 = vadd.f32 %v483, %v1351
        %v1353 = vpop.f32.mrf.mxu0
        %1354 = vmatprep.mubr.f32.mxu0 0.0
        %1355 = vmatmul.mubr.f32.gmra.mxu0 %v367
        %v1356 = vpop.f32.mrf.mxu0
        %v1357 = vadd.f32 %v483, %v1356
        %v1358 = vpop.f32.mrf.mxu0
        %1359 = vmatprep.mubr.f32.mxu0 0.0
        %1360 = vmatmul.mubr.f32.gmra.mxu0 %v368
        %v1361 = vpop.f32.mrf.mxu0
        %v1362 = vadd.f32 %v483, %v1361
        %v1363 = vpop.f32.mrf.mxu0
        %1364 = vmatprep.mubr.f32.mxu0 0.0
        %1365 = vmatmul.mubr.f32.gmra.mxu0 %v369
        %v1366 = vpop.f32.mrf.mxu0
        %v1367 = vadd.f32 %v483, %v1366
        %v1368 = vpop.f32.mrf.mxu0
        %1369 = vmatprep.mubr.f32.mxu0 0.0
        %1370 = vmatmul.mubr.f32.gmra.mxu0 %v370
        %v1371 = vpop.f32.mrf.mxu0
        %v1372 = vadd.f32 %v483, %v1371
        %v1373 = vpop.f32.mrf.mxu0
        %1374 = vmatprep.mubr.f32.mxu0 0.0
        %1375 = vmatmul.mubr.f32.gmra.mxu0 %v371
        %v1376 = vpop.f32.mrf.mxu0
        %v1377 = vadd.f32 %v483, %v1376
        %v1378 = vpop.f32.mrf.mxu0
        %1379 = vmatprep.mubr.f32.mxu0 0.0
        %1380 = vmatmul.mubr.f32.gmra.mxu0 %v372
        %v1381 = vpop.f32.mrf.mxu0
        %v1382 = vadd.f32 %v483, %v1381
        %v1383 = vpop.f32.mrf.mxu0
        %1384 = vmatprep.mubr.f32.mxu0 0.0
        %1385 = vmatmul.mubr.f32.gmra.mxu0 %v373
        %v1386 = vpop.f32.mrf.mxu0
        %v1387 = vadd.f32 %v483, %v1386
        %v1388 = vpop.f32.mrf.mxu0
        %1389 = vmatprep.mubr.f32.mxu0 0.0
        %1390 = vmatmul.mubr.f32.gmra.mxu0 %v374
        %v1391 = vpop.f32.mrf.mxu0
        %v1392 = vadd.f32 %v483, %v1391
        %v1393 = vpop.f32.mrf.mxu0
        %1394 = vmatprep.mubr.f32.mxu0 0.0
        %1395 = vmatmul.mubr.f32.gmra.mxu0 %v375
        %v1396 = vpop.f32.mrf.mxu0
        %v1397 = vadd.f32 %v483, %v1396
        %v1398 = vpop.f32.mrf.mxu0
        %1399 = vmatprep.mubr.f32.mxu0 0.0
        %1400 = vmatmul.mubr.f32.gmra.mxu0 %v376
        %v1401 = vpop.f32.mrf.mxu0
        %v1402 = vadd.f32 %v483, %v1401
        %v1403 = vpop.f32.mrf.mxu0
        %1404 = vmatprep.mubr.f32.mxu0 0.0
        %1405 = vmatmul.mubr.f32.gmra.mxu0 %v377
        %v1406 = vpop.f32.mrf.mxu0
        %v1407 = vadd.f32 %v483, %v1406
        %v1408 = vpop.f32.mrf.mxu0
        %1409 = vmatprep.mubr.f32.mxu0 0.0
        %1410 = vmatmul.mubr.f32.gmra.mxu0 %v378
        %v1411 = vpop.f32.mrf.mxu0
        %v1412 = vadd.f32 %v483, %v1411
        %v1413 = vpop.f32.mrf.mxu0
        %1414 = vmatprep.mubr.f32.mxu0 0.0
        %1415 = vmatmul.mubr.f32.gmra.mxu0 %v379
        %v1416 = vpop.f32.mrf.mxu0
        %v1417 = vadd.f32 %v483, %v1416
        %v1418 = vpop.f32.mrf.mxu0
        %1419 = vmatprep.mubr.f32.mxu0 0.0
        %1420 = vmatmul.mubr.f32.gmra.mxu0 %v380
        %v1421 = vpop.f32.mrf.mxu0
        %v1422 = vadd.f32 %v483, %v1421
        %v1423 = vpop.f32.mrf.mxu0
        %1424 = vmatprep.mubr.f32.mxu0 0.0
        %1425 = vmatmul.mubr.f32.gmra.mxu0 %v381
        %v1426 = vpop.f32.mrf.mxu0
        %v1427 = vadd.f32 %v483, %v1426
        %v1428 = vpop.f32.mrf.mxu0
        %1429 = vmatprep.mubr.f32.mxu0 0.0
        %1430 = vmatmul.mubr.f32.gmra.mxu0 %v382
        %v1431 = vpop.f32.mrf.mxu0
        %v1432 = vadd.f32 %v483, %v1431
        %v1433 = vpop.f32.mrf.mxu0
        %1434 = vmatprep.mubr.f32.mxu0 0.0
        %1435 = vmatmul.mubr.f32.gmra.mxu0 %v383
        %v1436 = vpop.f32.mrf.mxu0
        %v1437 = vadd.f32 %v483, %v1436
        %v1438 = vpop.f32.mrf.mxu0
        %1439 = vmatprep.mubr.f32.mxu0 0.0
        %1440 = vmatmul.mubr.f32.gmra.mxu0 %v384
        %v1441 = vpop.f32.mrf.mxu0
        %v1442 = vadd.f32 %v483, %v1441
        %v1443 = vpop.f32.mrf.mxu0
        %1444 = vmatprep.mubr.f32.mxu0 0.0
        %1445 = vmatmul.mubr.f32.gmra.mxu0 %v385
        %v1446 = vpop.f32.mrf.mxu0
        %v1447 = vadd.f32 %v483, %v1446
        %v1448 = vpop.f32.mrf.mxu0
        %1449 = vmatprep.mubr.f32.mxu0 0.0
        %1450 = vmatmul.mubr.f32.gmra.mxu0 %v386
        %v1451 = vpop.f32.mrf.mxu0
        %v1452 = vadd.f32 %v483, %v1451
        %v1453 = vpop.f32.mrf.mxu0
        %1454 = vmatprep.mubr.f32.mxu0 0.0
        %1455 = vmatmul.mubr.f32.gmra.mxu0 %v387
        %v1456 = vpop.f32.mrf.mxu0
        %v1457 = vadd.f32 %v483, %v1456
        %v1458 = vpop.f32.mrf.mxu0
        %1459 = vmatprep.mubr.f32.mxu0 0.0
        %1460 = vmatmul.mubr.f32.gmra.mxu0 %v388
        %v1461 = vpop.f32.mrf.mxu0
        %v1462 = vadd.f32 %v483, %v1461
        %v1463 = vpop.f32.mrf.mxu0
        %1464 = vmatprep.mubr.f32.mxu0 0.0
        %1465 = vmatmul.mubr.f32.gmra.mxu0 %v389
        %v1466 = vpop.f32.mrf.mxu0
        %v1467 = vadd.f32 %v483, %v1466
        %v1468 = vpop.f32.mrf.mxu0
        %1469 = vmatprep.mubr.f32.mxu0 0.0
        %1470 = vmatmul.mubr.f32.gmra.mxu0 %v390
        %v1471 = vpop.f32.mrf.mxu0
        %v1472 = vadd.f32 %v483, %v1471
        %v1473 = vpop.f32.mrf.mxu0
        %1474 = vmatprep.mubr.f32.mxu0 0.0
        %1475 = vmatmul.mubr.f32.gmra.mxu0 %v391
        %v1476 = vpop.f32.mrf.mxu0
        %v1477 = vadd.f32 %v483, %v1476
        %v1478 = vpop.f32.mrf.mxu0
        %1479 = vmatprep.mubr.f32.mxu0 0.0
        %1480 = vmatmul.mubr.f32.gmra.mxu0 %v392
        %v1481 = vpop.f32.mrf.mxu0
        %v1482 = vadd.f32 %v483, %v1481
        %v1483 = vpop.f32.mrf.mxu0
        %1484 = vmatprep.mubr.f32.mxu0 0.0
        %1485 = vmatmul.mubr.f32.gmra.mxu0 %v393
        %v1486 = vpop.f32.mrf.mxu0
        %v1487 = vadd.f32 %v483, %v1486
        %v1488 = vpop.f32.mrf.mxu0
        %1489 = vmatprep.mubr.f32.mxu0 0.0
        %1490 = vmatmul.mubr.f32.gmra.mxu0 %v394
        %v1491 = vpop.f32.mrf.mxu0
        %v1492 = vadd.f32 %v483, %v1491
        %v1493 = vpop.f32.mrf.mxu0
        %1494 = vmatprep.mubr.f32.mxu0 0.0
        %1495 = vmatmul.mubr.f32.gmra.mxu0 %v395
        %v1496 = vpop.f32.mrf.mxu0
        %v1497 = vadd.f32 %v483, %v1496
        %v1498 = vpop.f32.mrf.mxu0
        %1499 = vmatprep.mubr.f32.mxu0 0.0
        %1500 = vmatmul.mubr.f32.gmra.mxu0 %v396
        %v1501 = vpop.f32.mrf.mxu0
        %v1502 = vadd.f32 %v483, %v1501
        %v1503 = vpop.f32.mrf.mxu0
        %1504 = vmatprep.mubr.f32.mxu0 0.0
        %1505 = vmatmul.mubr.f32.gmra.mxu0 %v397
        %v1506 = vpop.f32.mrf.mxu0
        %v1507 = vadd.f32 %v483, %v1506
        %v1508 = vpop.f32.mrf.mxu0
        %1509 = vmatprep.mubr.f32.mxu0 0.0
        %1510 = vmatmul.mubr.f32.gmra.mxu0 %v398
        %v1511 = vpop.f32.mrf.mxu0
        %v1512 = vadd.f32 %v483, %v1511
        %v1513 = vpop.f32.mrf.mxu0
        %1514 = vmatprep.mubr.f32.mxu0 0.0
        %1515 = vmatmul.mubr.f32.gmra.mxu0 %v399
        %v1516 = vpop.f32.mrf.mxu0
        %v1517 = vadd.f32 %v483, %v1516
        %v1518 = vpop.f32.mrf.mxu0
        %1519 = vmatprep.mubr.f32.mxu0 0.0
        %1520 = vmatmul.mubr.f32.gmra.mxu0 %v400
        %v1521 = vpop.f32.mrf.mxu0
        %v1522 = vadd.f32 %v483, %v1521
        %v1523 = vpop.f32.mrf.mxu0
        %1524 = vmatprep.mubr.f32.mxu0 0.0
        %1525 = vmatmul.mubr.f32.gmra.mxu0 %v401
        %v1526 = vpop.f32.mrf.mxu0
        %v1527 = vadd.f32 %v483, %v1526
        %v1528 = vpop.f32.mrf.mxu0
        %1529 = vmatprep.mubr.f32.mxu0 0.0
        %1530 = vmatmul.mubr.f32.gmra.mxu0 %v402
        %v1531 = vpop.f32.mrf.mxu0
        %v1532 = vadd.f32 %v483, %v1531
        %v1533 = vpop.f32.mrf.mxu0
        %1534 = vmatprep.mubr.f32.mxu0 0.0
        %1535 = vmatmul.mubr.f32.gmra.mxu0 %v403
        %v1536 = vpop.f32.mrf.mxu0
        %v1537 = vadd.f32 %v483, %v1536
        %v1538 = vpop.f32.mrf.mxu0
        %1539 = vmatprep.mubr.f32.mxu0 0.0
        %1540 = vmatmul.mubr.f32.gmra.mxu0 %v404
        %v1541 = vpop.f32.mrf.mxu0
        %v1542 = vadd.f32 %v483, %v1541
        %v1543 = vpop.f32.mrf.mxu0
        %1544 = vmatprep.mubr.f32.mxu0 0.0
        %1545 = vmatmul.mubr.f32.gmra.mxu0 %v405
        %v1546 = vpop.f32.mrf.mxu0
        %v1547 = vadd.f32 %v483, %v1546
        %v1548 = vpop.f32.mrf.mxu0
        %1549 = vmatprep.mubr.f32.mxu0 0.0
        %1550 = vmatmul.mubr.f32.gmra.mxu0 %v406
        %v1551 = vpop.f32.mrf.mxu0
        %v1552 = vadd.f32 %v483, %v1551
        %v1553 = vpop.f32.mrf.mxu0
        %1554 = vmatprep.mubr.f32.mxu0 0.0
        %1555 = vmatmul.mubr.f32.gmra.mxu0 %v407
        %v1556 = vpop.f32.mrf.mxu0
        %v1557 = vadd.f32 %v483, %v1556
        %v1558 = vpop.f32.mrf.mxu0
        %1559 = vmatprep.mubr.f32.mxu0 0.0
        %1560 = vmatmul.mubr.f32.gmra.mxu0 %v408
        %v1561 = vpop.f32.mrf.mxu0
        %v1562 = vadd.f32 %v483, %v1561
        %v1563 = vpop.f32.mrf.mxu0
        %1564 = vmatprep.mubr.f32.mxu0 0.0
        %1565 = vmatmul.mubr.f32.gmra.mxu0 %v409
        %v1566 = vpop.f32.mrf.mxu0
        %v1567 = vadd.f32 %v483, %v1566
        %v1568 = vpop.f32.mrf.mxu0
        %1569 = vmatprep.mubr.f32.mxu0 0.0
        %1570 = vmatmul.mubr.f32.gmra.mxu0 %v410
        %v1571 = vpop.f32.mrf.mxu0
        %v1572 = vadd.f32 %v483, %v1571
        %v1573 = vpop.f32.mrf.mxu0
        %1574 = vmatprep.mubr.f32.mxu0 0.0
        %1575 = vmatmul.mubr.f32.gmra.mxu0 %v411
        %v1576 = vpop.f32.mrf.mxu0
        %v1577 = vadd.f32 %v483, %v1576
        %v1578 = vpop.f32.mrf.mxu0
        %1579 = vmatprep.mubr.f32.mxu0 0.0
        %1580 = vmatmul.mubr.f32.gmra.mxu0 %v412
        %v1581 = vpop.f32.mrf.mxu0
        %v1582 = vadd.f32 %v483, %v1581
        %v1583 = vpop.f32.mrf.mxu0
        %1584 = vmatprep.mubr.f32.mxu0 0.0
        %1585 = vmatmul.mubr.f32.gmra.mxu0 %v413
        %v1586 = vpop.f32.mrf.mxu0
        %v1587 = vadd.f32 %v483, %v1586
        %v1588 = vpop.f32.mrf.mxu0
        %1589 = vmatprep.mubr.f32.mxu0 0.0
        %1590 = vmatmul.mubr.f32.gmra.mxu0 %v414
        %v1591 = vpop.f32.mrf.mxu0
        %v1592 = vadd.f32 %v483, %v1591
        %v1593 = vpop.f32.mrf.mxu0
        %1594 = vmatprep.mubr.f32.mxu0 0.0
        %1595 = vmatmul.mubr.f32.gmra.mxu0 %v415
        %v1596 = vpop.f32.mrf.mxu0
        %v1597 = vadd.f32 %v483, %v1596
        %v1598 = vpop.f32.mrf.mxu0
        %1599 = vmatprep.mubr.f32.mxu0 0.0
        %1600 = vmatmul.mubr.f32.gmra.mxu0 %v416
        %v1601 = vpop.f32.mrf.mxu0
        %v1602 = vadd.f32 %v483, %v1601
        %v1603 = vpop.f32.mrf.mxu0
        %1604 = vmatprep.mubr.f32.mxu0 0.0
        %1605 = vmatmul.mubr.f32.gmra.mxu0 %v417
        %v1606 = vpop.f32.mrf.mxu0
        %v1607 = vadd.f32 %v483, %v1606
        %v1608 = vpop.f32.mrf.mxu0
        %1609 = vmatprep.mubr.f32.mxu0 0.0
        %1610 = vmatmul.mubr.f32.gmra.mxu0 %v418
        %v1611 = vpop.f32.mrf.mxu0
        %v1612 = vadd.f32 %v483, %v1611
        %v1613 = vpop.f32.mrf.mxu0
        %1614 = vmatprep.mubr.f32.mxu0 0.0
        %1615 = vmatmul.mubr.f32.gmra.mxu0 %v419
        %v1616 = vpop.f32.mrf.mxu0
        %v1617 = vadd.f32 %v483, %v1616
        %v1618 = vpop.f32.mrf.mxu0
        %1619 = vmatprep.mubr.f32.mxu0 0.0
        %1620 = vmatmul.mubr.f32.gmra.mxu0 %v420
        %v1621 = vpop.f32.mrf.mxu0
        %v1622 = vadd.f32 %v483, %v1621
        %v1623 = vpop.f32.mrf.mxu0
        %1624 = vmatprep.mubr.f32.mxu0 0.0
        %1625 = vmatmul.mubr.f32.gmra.mxu0 %v421
        %v1626 = vpop.f32.mrf.mxu0
        %v1627 = vadd.f32 %v483, %v1626
        %v1628 = vpop.f32.mrf.mxu0
        %1629 = vmatprep.mubr.f32.mxu0 0.0
        %1630 = vmatmul.mubr.f32.gmra.mxu0 %v422
        %v1631 = vpop.f32.mrf.mxu0
        %v1632 = vadd.f32 %v483, %v1631
        %v1633 = vpop.f32.mrf.mxu0
        %1634 = vmatprep.mubr.f32.mxu0 0.0
        %1635 = vmatmul.mubr.f32.gmra.mxu0 %v423
        %v1636 = vpop.f32.mrf.mxu0
        %v1637 = vadd.f32 %v483, %v1636
        %v1638 = vpop.f32.mrf.mxu0
        %1639 = vmatprep.mubr.f32.mxu0 0.0
        %1640 = vmatmul.mubr.f32.gmra.mxu0 %v424
        %v1641 = vpop.f32.mrf.mxu0
        %v1642 = vadd.f32 %v483, %v1641
        %v1643 = vpop.f32.mrf.mxu0
        %1644 = vmatprep.mubr.f32.mxu0 0.0
        %1645 = vmatmul.mubr.f32.gmra.mxu0 %v425
        %v1646 = vpop.f32.mrf.mxu0
        %v1647 = vadd.f32 %v483, %v1646
        %v1648 = vpop.f32.mrf.mxu0
        %1649 = vmatprep.mubr.f32.mxu0 0.0
        %1650 = vmatmul.mubr.f32.gmra.mxu0 %v426
        %v1651 = vpop.f32.mrf.mxu0
        %v1652 = vadd.f32 %v483, %v1651
        %v1653 = vpop.f32.mrf.mxu0
        %1654 = vmatprep.mubr.f32.mxu0 0.0
        %1655 = vmatmul.mubr.f32.gmra.mxu0 %v427
        %v1656 = vpop.f32.mrf.mxu0
        %v1657 = vadd.f32 %v483, %v1656
        %v1658 = vpop.f32.mrf.mxu0
        %1659 = vmatprep.mubr.f32.mxu0 0.0
        %1660 = vmatmul.mubr.f32.gmra.mxu0 %v428
        %v1661 = vpop.f32.mrf.mxu0
        %v1662 = vadd.f32 %v483, %v1661
        %v1663 = vpop.f32.mrf.mxu0
        %1664 = vmatprep.mubr.f32.mxu0 0.0
        %1665 = vmatmul.mubr.f32.gmra.mxu0 %v429
        %v1666 = vpop.f32.mrf.mxu0
        %v1667 = vadd.f32 %v483, %v1666
        %v1668 = vpop.f32.mrf.mxu0
        %1669 = vmatprep.mubr.f32.mxu0 0.0
        %1670 = vmatmul.mubr.f32.gmra.mxu0 %v430
        %v1671 = vpop.f32.mrf.mxu0
        %v1672 = vadd.f32 %v483, %v1671
        %v1673 = vpop.f32.mrf.mxu0
        %1674 = vmatprep.mubr.f32.mxu0 0.0
        %1675 = vmatmul.mubr.f32.gmra.mxu0 %v431
        %v1676 = vpop.f32.mrf.mxu0
        %v1677 = vadd.f32 %v483, %v1676
        %v1678 = vpop.f32.mrf.mxu0
        %1679 = vmatprep.mubr.f32.mxu0 0.0
        %1680 = vmatmul.mubr.f32.gmra.mxu0 %v432
        %v1681 = vpop.f32.mrf.mxu0
        %v1682 = vadd.f32 %v483, %v1681
        %v1683 = vpop.f32.mrf.mxu0
        %1684 = vmatprep.mubr.f32.mxu0 0.0
        %1685 = vmatmul.mubr.f32.gmra.mxu0 %v433
        %v1686 = vpop.f32.mrf.mxu0
        %v1687 = vadd.f32 %v483, %v1686
        %v1688 = vpop.f32.mrf.mxu0
        %1689 = vmatprep.mubr.f32.mxu0 0.0
        %1690 = vmatmul.mubr.f32.gmra.mxu0 %v434
        %v1691 = vpop.f32.mrf.mxu0
        %v1692 = vadd.f32 %v483, %v1691
        %v1693 = vpop.f32.mrf.mxu0
        %1694 = vmatprep.mubr.f32.mxu0 0.0
        %1695 = vmatmul.mubr.f32.gmra.mxu0 %v435
        %v1696 = vpop.f32.mrf.mxu0
        %v1697 = vadd.f32 %v483, %v1696
        %v1698 = vpop.f32.mrf.mxu0
        %1699 = vmatprep.mubr.f32.mxu0 0.0
        %1700 = vmatmul.mubr.f32.gmra.mxu0 %v436
        %v1701 = vpop.f32.mrf.mxu0
        %v1702 = vadd.f32 %v483, %v1701
        %v1703 = vpop.f32.mrf.mxu0
        %1704 = vmatprep.mubr.f32.mxu0 0.0
        %1705 = vmatmul.mubr.f32.gmra.mxu0 %v437
        %v1706 = vpop.f32.mrf.mxu0
        %v1707 = vadd.f32 %v483, %v1706
        %v1708 = vpop.f32.mrf.mxu0
        %1709 = vmatprep.mubr.f32.mxu0 0.0
        %1710 = vmatmul.mubr.f32.gmra.mxu0 %v438
        %v1711 = vpop.f32.mrf.mxu0
        %v1712 = vadd.f32 %v483, %v1711
        %v1713 = vpop.f32.mrf.mxu0
        %1714 = vmatprep.mubr.f32.mxu0 0.0
        %1715 = vmatmul.mubr.f32.gmra.mxu0 %v439
        %v1716 = vpop.f32.mrf.mxu0
        %v1717 = vadd.f32 %v483, %v1716
        %v1718 = vpop.f32.mrf.mxu0
        %1719 = vmatprep.mubr.f32.mxu0 0.0
        %1720 = vmatmul.mubr.f32.gmra.mxu0 %v440
        %v1721 = vpop.f32.mrf.mxu0
        %v1722 = vadd.f32 %v483, %v1721
        %v1723 = vpop.f32.mrf.mxu0
        %1724 = vmatprep.mubr.f32.mxu0 0.0
        %1725 = vmatmul.mubr.f32.gmra.mxu0 %v441
        %v1726 = vpop.f32.mrf.mxu0
        %v1727 = vadd.f32 %v483, %v1726
        %v1728 = vpop.f32.mrf.mxu0
        %1729 = vmatprep.mubr.f32.mxu0 0.0
        %1730 = vmatmul.mubr.f32.gmra.mxu0 %v442
        %v1731 = vpop.f32.mrf.mxu0
        %v1732 = vadd.f32 %v483, %v1731
        %v1733 = vpop.f32.mrf.mxu0
        %1734 = vmatprep.mubr.f32.mxu0 0.0
        %1735 = vmatmul.mubr.f32.gmra.mxu0 %v443
        %v1736 = vpop.f32.mrf.mxu0
        %v1737 = vadd.f32 %v483, %v1736
        %v1738 = vpop.f32.mrf.mxu0
        %1739 = vmatprep.mubr.f32.mxu0 0.0
        %1740 = vmatmul.mubr.f32.gmra.mxu0 %v444
        %v1741 = vpop.f32.mrf.mxu0
        %v1742 = vadd.f32 %v483, %v1741
        %v1743 = vpop.f32.mrf.mxu0
        %1744 = vmatprep.mubr.f32.mxu0 0.0
        %1745 = vmatmul.mubr.f32.gmra.mxu0 %v445
        %v1746 = vpop.f32.mrf.mxu0
        %v1747 = vadd.f32 %v483, %v1746
        %v1748 = vpop.f32.mrf.mxu0
        %1749 = vmatprep.mubr.f32.mxu0 0.0
        %1750 = vmatmul.mubr.f32.gmra.mxu0 %v446
        %v1751 = vpop.f32.mrf.mxu0
        %v1752 = vadd.f32 %v483, %v1751
        %v1753 = vpop.f32.mrf.mxu0
        %1754 = vmatprep.mubr.f32.mxu0 0.0
        %1755 = vmatmul.mubr.f32.gmra.mxu0 %v447
        %v1756 = vpop.f32.mrf.mxu0
        %v1757 = vadd.f32 %v483, %v1756
        %v1758 = vpop.f32.mrf.mxu0
        %1759 = vmatprep.mubr.f32.mxu0 0.0
        %1760 = vmatmul.mubr.f32.gmra.mxu0 %v448
        %v1761 = vpop.f32.mrf.mxu0
        %v1762 = vadd.f32 %v483, %v1761
        %v1763 = vpop.f32.mrf.mxu0
        %1764 = vmatprep.mubr.f32.mxu0 0.0
        %1765 = vmatmul.mubr.f32.gmra.mxu0 %v449
        %v1766 = vpop.f32.mrf.mxu0
        %v1767 = vadd.f32 %v483, %v1766
        %v1768 = vpop.f32.mrf.mxu0
        %1769 = vmatprep.mubr.f32.mxu0 0.0
        %1770 = vmatmul.mubr.f32.gmra.mxu0 %v450
        %v1771 = vpop.f32.mrf.mxu0
        %v1772 = vadd.f32 %v483, %v1771
        %v1773 = vpop.f32.mrf.mxu0
        %1774 = vmatprep.mubr.f32.mxu0 0.0
        %1775 = vmatmul.mubr.f32.gmra.mxu0 %v451
        %v1776 = vpop.f32.mrf.mxu0
        %v1777 = vadd.f32 %v483, %v1776
        %v1778 = vpop.f32.mrf.mxu0
        %1779 = vmatprep.mubr.f32.mxu0 0.0
        %1780 = vmatmul.mubr.f32.gmra.mxu0 %v452
        %v1781 = vpop.f32.mrf.mxu0
        %v1782 = vadd.f32 %v483, %v1781
        %v1783 = vpop.f32.mrf.mxu0
        %1784 = vmatprep.mubr.f32.mxu0 0.0
        %1785 = vmatmul.mubr.f32.gmra.mxu0 %v453
        %v1786 = vpop.f32.mrf.mxu0
        %v1787 = vadd.f32 %v483, %v1786
        %v1788 = vpop.f32.mrf.mxu0
        %1789 = vmatprep.mubr.f32.mxu0 0.0
        %1790 = vmatmul.mubr.f32.gmra.mxu0 %v454
        %v1791 = vpop.f32.mrf.mxu0
        %v1792 = vadd.f32 %v483, %v1791
        %v1793 = vpop.f32.mrf.mxu0
        %1794 = vmatprep.mubr.f32.mxu0 0.0
        %1795 = vmatmul.mubr.f32.gmra.mxu0 %v455
        %v1796 = vpop.f32.mrf.mxu0
        %v1797 = vadd.f32 %v483, %v1796
        %v1798 = vpop.f32.mrf.mxu0
        %1799 = vmatprep.mubr.f32.mxu0 0.0
        %1800 = vmatmul.mubr.f32.gmra.mxu0 %v456
        %v1801 = vpop.f32.mrf.mxu0
        %v1802 = vadd.f32 %v483, %v1801
        %v1803 = vpop.f32.mrf.mxu0
        %1804 = vmatprep.mubr.f32.mxu0 0.0
        %1805 = vmatmul.mubr.f32.gmra.mxu0 %v457
        %v1806 = vpop.f32.mrf.mxu0
        %v1807 = vadd.f32 %v483, %v1806
        %v1808 = vpop.f32.mrf.mxu0
        %1809 = vmatprep.mubr.f32.mxu0 0.0
        %1810 = vmatmul.mubr.f32.gmra.mxu0 %v458
        %v1811 = vpop.f32.mrf.mxu0
        %v1812 = vadd.f32 %v483, %v1811
        %v1813 = vpop.f32.mrf.mxu0
        %1814 = vmatprep.mubr.f32.mxu0 0.0
        %1815 = vmatmul.mubr.f32.gmra.mxu0 %v459
        %v1816 = vpop.f32.mrf.mxu0
        %v1817 = vadd.f32 %v483, %v1816
        %v1818 = vpop.f32.mrf.mxu0
        %1819 = vmatprep.mubr.f32.mxu0 0.0
        %1820 = vmatmul.mubr.f32.gmra.mxu0 %v460
        %v1821 = vpop.f32.mrf.mxu0
        %v1822 = vadd.f32 %v483, %v1821
        %v1823 = vpop.f32.mrf.mxu0
        %1824 = vmatprep.mubr.f32.mxu0 0.0
        %1825 = vmatmul.mubr.f32.gmra.mxu0 %v461
        %v1826 = vpop.f32.mrf.mxu0
        %v1827 = vadd.f32 %v483, %v1826
        %v1828 = vpop.f32.mrf.mxu0
        %1829 = vdwg.mxu0
        %vm1830 = vcmask 64512
        %1831 = vst.msk [vmem:[%s204] sm:$0xff] %vm1830, %v552
        %1832 = vst.msk [vmem:[%s204 + $0x8] sm:$0xff] %vm1830, %v557
        %1833 = vst.msk [vmem:[%s204 + $0x10] sm:$0xff] %vm1830, %v562
        %1834 = vst.msk [vmem:[%s204 + $0x18] sm:$0xff] %vm1830, %v567
        %1835 = vst.msk [vmem:[%s204 + $0x20] sm:$0xff] %vm1830, %v572
        %1836 = vst.msk [vmem:[%s204 + $0x28] sm:$0xff] %vm1830, %v577
        %1837 = vst.msk [vmem:[%s204 + $0x30] sm:$0xff] %vm1830, %v582
        %1838 = vst.msk [vmem:[%s204 + $0x38] sm:$0xff] %vm1830, %v587
        %1839 = vst.msk [vmem:[%s204 + $0x40] sm:$0xff] %vm1830, %v592
        %1840 = vst.msk [vmem:[%s204 + $0x48] sm:$0xff] %vm1830, %v597
        %1841 = vst.msk [vmem:[%s204 + $0x50] sm:$0xff] %vm1830, %v602
        %1842 = vst.msk [vmem:[%s204 + $0x58] sm:$0xff] %vm1830, %v607
        %1843 = vst.msk [vmem:[%s204 + $0x60] sm:$0xff] %vm1830, %v612
        %1844 = vst.msk [vmem:[%s204 + $0x68] sm:$0xff] %vm1830, %v617
        %1845 = vst.msk [vmem:[%s204 + $0x70] sm:$0xff] %vm1830, %v622
        %1846 = vst.msk [vmem:[%s204 + $0x78] sm:$0xff] %vm1830, %v627
        %1847 = vst.msk [vmem:[%s204 + $0x80] sm:$0xff] %vm1830, %v632
        %1848 = vst.msk [vmem:[%s204 + $0x88] sm:$0xff] %vm1830, %v637
        %1849 = vst.msk [vmem:[%s204 + $0x90] sm:$0xff] %vm1830, %v642
        %1850 = vst.msk [vmem:[%s204 + $0x98] sm:$0xff] %vm1830, %v647
        %1851 = vst.msk [vmem:[%s204 + $0xa0] sm:$0xff] %vm1830, %v652
        %1852 = vst.msk [vmem:[%s204 + $0xa8] sm:$0xff] %vm1830, %v657
        %1853 = vst.msk [vmem:[%s204 + $0xb0] sm:$0xff] %vm1830, %v662
        %1854 = vst.msk [vmem:[%s204 + $0xb8] sm:$0xff] %vm1830, %v667
        %1855 = vst.msk [vmem:[%s204 + $0xc0] sm:$0xff] %vm1830, %v672
        %1856 = vst.msk [vmem:[%s204 + $0xc8] sm:$0xff] %vm1830, %v677
        %1857 = vst.msk [vmem:[%s204 + $0xd0] sm:$0xff] %vm1830, %v682
        %1858 = vst.msk [vmem:[%s204 + $0xd8] sm:$0xff] %vm1830, %v687
        %1859 = vst.msk [vmem:[%s204 + $0xe0] sm:$0xff] %vm1830, %v692
        %1860 = vst.msk [vmem:[%s204 + $0xe8] sm:$0xff] %vm1830, %v697
        %1861 = vst.msk [vmem:[%s204 + $0xf0] sm:$0xff] %vm1830, %v702
        %1862 = vst.msk [vmem:[%s204 + $0xf8] sm:$0xff] %vm1830, %v707
        %1863 = vst.msk [vmem:[%s204 + $0x100] sm:$0xff] %vm1830, %v712
        %1864 = vst.msk [vmem:[%s204 + $0x108] sm:$0xff] %vm1830, %v717
        %1865 = vst.msk [vmem:[%s204 + $0x110] sm:$0xff] %vm1830, %v722
        %1866 = vst.msk [vmem:[%s204 + $0x118] sm:$0xff] %vm1830, %v727
        %1867 = vst.msk [vmem:[%s204 + $0x120] sm:$0xff] %vm1830, %v732
        %1868 = vst.msk [vmem:[%s204 + $0x128] sm:$0xff] %vm1830, %v737
        %1869 = vst.msk [vmem:[%s204 + $0x130] sm:$0xff] %vm1830, %v742
        %1870 = vst.msk [vmem:[%s204 + $0x138] sm:$0xff] %vm1830, %v747
        %1871 = vst.msk [vmem:[%s204 + $0x140] sm:$0xff] %vm1830, %v752
        %1872 = vst.msk [vmem:[%s204 + $0x148] sm:$0xff] %vm1830, %v757
        %1873 = vst.msk [vmem:[%s204 + $0x150] sm:$0xff] %vm1830, %v762
        %1874 = vst.msk [vmem:[%s204 + $0x158] sm:$0xff] %vm1830, %v767
        %1875 = vst.msk [vmem:[%s204 + $0x160] sm:$0xff] %vm1830, %v772
        %1876 = vst.msk [vmem:[%s204 + $0x168] sm:$0xff] %vm1830, %v777
        %1877 = vst.msk [vmem:[%s204 + $0x170] sm:$0xff] %vm1830, %v782
        %1878 = vst.msk [vmem:[%s204 + $0x178] sm:$0xff] %vm1830, %v787
        %1879 = vst.msk [vmem:[%s204 + $0x180] sm:$0xff] %vm1830, %v792
        %1880 = vst.msk [vmem:[%s204 + $0x188] sm:$0xff] %vm1830, %v797
        %1881 = vst.msk [vmem:[%s204 + $0x190] sm:$0xff] %vm1830, %v802
        %1882 = vst.msk [vmem:[%s204 + $0x198] sm:$0xff] %vm1830, %v807
        %1883 = vst.msk [vmem:[%s204 + $0x1a0] sm:$0xff] %vm1830, %v812
        %1884 = vst.msk [vmem:[%s204 + $0x1a8] sm:$0xff] %vm1830, %v817
        %1885 = vst.msk [vmem:[%s204 + $0x1b0] sm:$0xff] %vm1830, %v822
        %1886 = vst.msk [vmem:[%s204 + $0x1b8] sm:$0xff] %vm1830, %v827
        %1887 = vst.msk [vmem:[%s204 + $0x1c0] sm:$0xff] %vm1830, %v832
        %1888 = vst.msk [vmem:[%s204 + $0x1c8] sm:$0xff] %vm1830, %v837
        %1889 = vst.msk [vmem:[%s204 + $0x1d0] sm:$0xff] %vm1830, %v842
        %1890 = vst.msk [vmem:[%s204 + $0x1d8] sm:$0xff] %vm1830, %v847
        %1891 = vst.msk [vmem:[%s204 + $0x1e0] sm:$0xff] %vm1830, %v852
        %1892 = vst.msk [vmem:[%s204 + $0x1e8] sm:$0xff] %vm1830, %v857
        %1893 = vst.msk [vmem:[%s204 + $0x1f0] sm:$0xff] %vm1830, %v862
        %1894 = vst.msk [vmem:[%s204 + $0x1f8] sm:$0xff] %vm1830, %v867
        %1895 = vst.msk [vmem:[%s204 + $0x200] sm:$0xff] %vm1830, %v872
        %1896 = vst.msk [vmem:[%s204 + $0x208] sm:$0xff] %vm1830, %v877
        %1897 = vst.msk [vmem:[%s204 + $0x210] sm:$0xff] %vm1830, %v882
        %1898 = vst.msk [vmem:[%s204 + $0x218] sm:$0xff] %vm1830, %v887
        %1899 = vst.msk [vmem:[%s204 + $0x220] sm:$0xff] %vm1830, %v892
        %1900 = vst.msk [vmem:[%s204 + $0x228] sm:$0xff] %vm1830, %v897
        %1901 = vst.msk [vmem:[%s204 + $0x230] sm:$0xff] %vm1830, %v902
        %1902 = vst.msk [vmem:[%s204 + $0x238] sm:$0xff] %vm1830, %v907
        %1903 = vst.msk [vmem:[%s204 + $0x240] sm:$0xff] %vm1830, %v912
        %1904 = vst.msk [vmem:[%s204 + $0x248] sm:$0xff] %vm1830, %v917
        %1905 = vst.msk [vmem:[%s204 + $0x250] sm:$0xff] %vm1830, %v922
        %1906 = vst.msk [vmem:[%s204 + $0x258] sm:$0xff] %vm1830, %v927
        %1907 = vst.msk [vmem:[%s204 + $0x260] sm:$0xff] %vm1830, %v932
        %1908 = vst.msk [vmem:[%s204 + $0x268] sm:$0xff] %vm1830, %v937
        %1909 = vst.msk [vmem:[%s204 + $0x270] sm:$0xff] %vm1830, %v942
        %1910 = vst.msk [vmem:[%s204 + $0x278] sm:$0xff] %vm1830, %v947
        %1911 = vst.msk [vmem:[%s204 + $0x280] sm:$0xff] %vm1830, %v952
        %1912 = vst.msk [vmem:[%s204 + $0x288] sm:$0xff] %vm1830, %v957
        %1913 = vst.msk [vmem:[%s204 + $0x290] sm:$0xff] %vm1830, %v962
        %1914 = vst.msk [vmem:[%s204 + $0x298] sm:$0xff] %vm1830, %v967
        %1915 = vst.msk [vmem:[%s204 + $0x2a0] sm:$0xff] %vm1830, %v972
        %1916 = vst.msk [vmem:[%s204 + $0x2a8] sm:$0xff] %vm1830, %v977
        %1917 = vst.msk [vmem:[%s204 + $0x2b0] sm:$0xff] %vm1830, %v982
        %1918 = vst.msk [vmem:[%s204 + $0x2b8] sm:$0xff] %vm1830, %v987
        %1919 = vst.msk [vmem:[%s204 + $0x2c0] sm:$0xff] %vm1830, %v992
        %1920 = vst.msk [vmem:[%s204 + $0x2c8] sm:$0xff] %vm1830, %v997
        %1921 = vst.msk [vmem:[%s204 + $0x2d0] sm:$0xff] %vm1830, %v1002
        %1922 = vst.msk [vmem:[%s204 + $0x2d8] sm:$0xff] %vm1830, %v1007
        %1923 = vst.msk [vmem:[%s204 + $0x2e0] sm:$0xff] %vm1830, %v1012
        %1924 = vst.msk [vmem:[%s204 + $0x2e8] sm:$0xff] %vm1830, %v1017
        %1925 = vst.msk [vmem:[%s204 + $0x2f0] sm:$0xff] %vm1830, %v1022
        %1926 = vst.msk [vmem:[%s204 + $0x2f8] sm:$0xff] %vm1830, %v1027
        %1927 = vst.msk [vmem:[%s204 + $0x300] sm:$0xff] %vm1830, %v1032
        %1928 = vst.msk [vmem:[%s204 + $0x308] sm:$0xff] %vm1830, %v1037
        %1929 = vst.msk [vmem:[%s204 + $0x310] sm:$0xff] %vm1830, %v1042
        %1930 = vst.msk [vmem:[%s204 + $0x318] sm:$0xff] %vm1830, %v1047
        %1931 = vst.msk [vmem:[%s204 + $0x320] sm:$0xff] %vm1830, %v1052
        %1932 = vst.msk [vmem:[%s204 + $0x328] sm:$0xff] %vm1830, %v1057
        %1933 = vst.msk [vmem:[%s204 + $0x330] sm:$0xff] %vm1830, %v1062
        %1934 = vst.msk [vmem:[%s204 + $0x338] sm:$0xff] %vm1830, %v1067
        %1935 = vst.msk [vmem:[%s204 + $0x340] sm:$0xff] %vm1830, %v1072
        %1936 = vst.msk [vmem:[%s204 + $0x348] sm:$0xff] %vm1830, %v1077
        %1937 = vst.msk [vmem:[%s204 + $0x350] sm:$0xff] %vm1830, %v1082
        %1938 = vst.msk [vmem:[%s204 + $0x358] sm:$0xff] %vm1830, %v1087
        %1939 = vst.msk [vmem:[%s204 + $0x360] sm:$0xff] %vm1830, %v1092
        %1940 = vst.msk [vmem:[%s204 + $0x368] sm:$0xff] %vm1830, %v1097
        %1941 = vst.msk [vmem:[%s204 + $0x370] sm:$0xff] %vm1830, %v1102
        %1942 = vst.msk [vmem:[%s204 + $0x378] sm:$0xff] %vm1830, %v1107
        %1943 = vst.msk [vmem:[%s204 + $0x380] sm:$0xff] %vm1830, %v1112
        %1944 = vst.msk [vmem:[%s204 + $0x388] sm:$0xff] %vm1830, %v1117
        %1945 = vst.msk [vmem:[%s204 + $0x390] sm:$0xff] %vm1830, %v1122
        %1946 = vst.msk [vmem:[%s204 + $0x398] sm:$0xff] %vm1830, %v1127
        %1947 = vst.msk [vmem:[%s204 + $0x3a0] sm:$0xff] %vm1830, %v1132
        %1948 = vst.msk [vmem:[%s204 + $0x3a8] sm:$0xff] %vm1830, %v1137
        %1949 = vst.msk [vmem:[%s204 + $0x3b0] sm:$0xff] %vm1830, %v1142
        %1950 = vst.msk [vmem:[%s204 + $0x3b8] sm:$0xff] %vm1830, %v1147
        %1951 = vst.msk [vmem:[%s204 + $0x3c0] sm:$0xff] %vm1830, %v1152
        %1952 = vst.msk [vmem:[%s204 + $0x3c8] sm:$0xff] %vm1830, %v1157
        %1953 = vst.msk [vmem:[%s204 + $0x3d0] sm:$0xff] %vm1830, %v1162
        %1954 = vst.msk [vmem:[%s204 + $0x3d8] sm:$0xff] %vm1830, %v1167
        %1955 = vst.msk [vmem:[%s204 + $0x3e0] sm:$0xff] %vm1830, %v1172
        %1956 = vst.msk [vmem:[%s204 + $0x3e8] sm:$0xff] %vm1830, %v1177
        %1957 = vst.msk [vmem:[%s204 + $0x3f0] sm:$0xff] %vm1830, %v1182
        %1958 = vst.msk [vmem:[%s204 + $0x3f8] sm:$0xff] %vm1830, %v1187
        %1959 = vst.msk [vmem:[%s204 + $0x400] sm:$0xff] %vm1830, %v1192
        %1960 = vst.msk [vmem:[%s204 + $0x408] sm:$0xff] %vm1830, %v1197
        %1961 = vst.msk [vmem:[%s204 + $0x410] sm:$0xff] %vm1830, %v1202
        %1962 = vst.msk [vmem:[%s204 + $0x418] sm:$0xff] %vm1830, %v1207
        %1963 = vst.msk [vmem:[%s204 + $0x420] sm:$0xff] %vm1830, %v1212
        %1964 = vst.msk [vmem:[%s204 + $0x428] sm:$0xff] %vm1830, %v1217
        %1965 = vst.msk [vmem:[%s204 + $0x430] sm:$0xff] %vm1830, %v1222
        %1966 = vst.msk [vmem:[%s204 + $0x438] sm:$0xff] %vm1830, %v1227
        %1967 = vst.msk [vmem:[%s204 + $0x440] sm:$0xff] %vm1830, %v1232
        %1968 = vst.msk [vmem:[%s204 + $0x448] sm:$0xff] %vm1830, %v1237
        %1969 = vst.msk [vmem:[%s204 + $0x450] sm:$0xff] %vm1830, %v1242
        %1970 = vst.msk [vmem:[%s204 + $0x458] sm:$0xff] %vm1830, %v1247
        %1971 = vst.msk [vmem:[%s204 + $0x460] sm:$0xff] %vm1830, %v1252
        %1972 = vst.msk [vmem:[%s204 + $0x468] sm:$0xff] %vm1830, %v1257
        %1973 = vst.msk [vmem:[%s204 + $0x470] sm:$0xff] %vm1830, %v1262
        %1974 = vst.msk [vmem:[%s204 + $0x478] sm:$0xff] %vm1830, %v1267
        %1975 = vst.msk [vmem:[%s204 + $0x480] sm:$0xff] %vm1830, %v1272
        %1976 = vst.msk [vmem:[%s204 + $0x488] sm:$0xff] %vm1830, %v1277
        %1977 = vst.msk [vmem:[%s204 + $0x490] sm:$0xff] %vm1830, %v1282
        %1978 = vst.msk [vmem:[%s204 + $0x498] sm:$0xff] %vm1830, %v1287
        %1979 = vst.msk [vmem:[%s204 + $0x4a0] sm:$0xff] %vm1830, %v1292
        %1980 = vst.msk [vmem:[%s204 + $0x4a8] sm:$0xff] %vm1830, %v1297
        %1981 = vst.msk [vmem:[%s204 + $0x4b0] sm:$0xff] %vm1830, %v1302
        %1982 = vst.msk [vmem:[%s204 + $0x4b8] sm:$0xff] %vm1830, %v1307
        %1983 = vst.msk [vmem:[%s204 + $0x4c0] sm:$0xff] %vm1830, %v1312
        %1984 = vst.msk [vmem:[%s204 + $0x4c8] sm:$0xff] %vm1830, %v1317
        %1985 = vst.msk [vmem:[%s204 + $0x4d0] sm:$0xff] %vm1830, %v1322
        %1986 = vst.msk [vmem:[%s204 + $0x4d8] sm:$0xff] %vm1830, %v1327
        %1987 = vst.msk [vmem:[%s204 + $0x4e0] sm:$0xff] %vm1830, %v1332
        %1988 = vst.msk [vmem:[%s204 + $0x4e8] sm:$0xff] %vm1830, %v1337
        %1989 = vst.msk [vmem:[%s204 + $0x4f0] sm:$0xff] %vm1830, %v1342
        %1990 = vst.msk [vmem:[%s204 + $0x4f8] sm:$0xff] %vm1830, %v1347
        %1991 = vst.msk [vmem:[%s204 + $0x500] sm:$0xff] %vm1830, %v1352
        %1992 = vst.msk [vmem:[%s204 + $0x508] sm:$0xff] %vm1830, %v1357
        %1993 = vst.msk [vmem:[%s204 + $0x510] sm:$0xff] %vm1830, %v1362
        %1994 = vst.msk [vmem:[%s204 + $0x518] sm:$0xff] %vm1830, %v1367
        %1995 = vst.msk [vmem:[%s204 + $0x520] sm:$0xff] %vm1830, %v1372
        %1996 = vst.msk [vmem:[%s204 + $0x528] sm:$0xff] %vm1830, %v1377
        %1997 = vst.msk [vmem:[%s204 + $0x530] sm:$0xff] %vm1830, %v1382
        %1998 = vst.msk [vmem:[%s204 + $0x538] sm:$0xff] %vm1830, %v1387
        %1999 = vst.msk [vmem:[%s204 + $0x540] sm:$0xff] %vm1830, %v1392
        %2000 = vst.msk [vmem:[%s204 + $0x548] sm:$0xff] %vm1830, %v1397
        %2001 = vst.msk [vmem:[%s204 + $0x550] sm:$0xff] %vm1830, %v1402
        %2002 = vst.msk [vmem:[%s204 + $0x558] sm:$0xff] %vm1830, %v1407
        %2003 = vst.msk [vmem:[%s204 + $0x560] sm:$0xff] %vm1830, %v1412
        %2004 = vst.msk [vmem:[%s204 + $0x568] sm:$0xff] %vm1830, %v1417
        %2005 = vst.msk [vmem:[%s204 + $0x570] sm:$0xff] %vm1830, %v1422
        %2006 = vst.msk [vmem:[%s204 + $0x578] sm:$0xff] %vm1830, %v1427
        %2007 = vst.msk [vmem:[%s204 + $0x580] sm:$0xff] %vm1830, %v1432
        %2008 = vst.msk [vmem:[%s204 + $0x588] sm:$0xff] %vm1830, %v1437
        %2009 = vst.msk [vmem:[%s204 + $0x590] sm:$0xff] %vm1830, %v1442
        %2010 = vst.msk [vmem:[%s204 + $0x598] sm:$0xff] %vm1830, %v1447
        %2011 = vst.msk [vmem:[%s204 + $0x5a0] sm:$0xff] %vm1830, %v1452
        %2012 = vst.msk [vmem:[%s204 + $0x5a8] sm:$0xff] %vm1830, %v1457
        %2013 = vst.msk [vmem:[%s204 + $0x5b0] sm:$0xff] %vm1830, %v1462
        %2014 = vst.msk [vmem:[%s204 + $0x5b8] sm:$0xff] %vm1830, %v1467
        %2015 = vst.msk [vmem:[%s204 + $0x5c0] sm:$0xff] %vm1830, %v1472
        %2016 = vst.msk [vmem:[%s204 + $0x5c8] sm:$0xff] %vm1830, %v1477
        %2017 = vst.msk [vmem:[%s204 + $0x5d0] sm:$0xff] %vm1830, %v1482
        %2018 = vst.msk [vmem:[%s204 + $0x5d8] sm:$0xff] %vm1830, %v1487
        %2019 = vst.msk [vmem:[%s204 + $0x5e0] sm:$0xff] %vm1830, %v1492
        %2020 = vst.msk [vmem:[%s204 + $0x5e8] sm:$0xff] %vm1830, %v1497
        %2021 = vst.msk [vmem:[%s204 + $0x5f0] sm:$0xff] %vm1830, %v1502
        %2022 = vst.msk [vmem:[%s204 + $0x5f8] sm:$0xff] %vm1830, %v1507
        %2023 = vst.msk [vmem:[%s204 + $0x600] sm:$0xff] %vm1830, %v1512
        %2024 = vst.msk [vmem:[%s204 + $0x608] sm:$0xff] %vm1830, %v1517
        %2025 = vst.msk [vmem:[%s204 + $0x610] sm:$0xff] %vm1830, %v1522
        %2026 = vst.msk [vmem:[%s204 + $0x618] sm:$0xff] %vm1830, %v1527
        %2027 = vst.msk [vmem:[%s204 + $0x620] sm:$0xff] %vm1830, %v1532
        %2028 = vst.msk [vmem:[%s204 + $0x628] sm:$0xff] %vm1830, %v1537
        %2029 = vst.msk [vmem:[%s204 + $0x630] sm:$0xff] %vm1830, %v1542
        %2030 = vst.msk [vmem:[%s204 + $0x638] sm:$0xff] %vm1830, %v1547
        %2031 = vst.msk [vmem:[%s204 + $0x640] sm:$0xff] %vm1830, %v1552
        %2032 = vst.msk [vmem:[%s204 + $0x648] sm:$0xff] %vm1830, %v1557
        %2033 = vst.msk [vmem:[%s204 + $0x650] sm:$0xff] %vm1830, %v1562
        %2034 = vst.msk [vmem:[%s204 + $0x658] sm:$0xff] %vm1830, %v1567
        %2035 = vst.msk [vmem:[%s204 + $0x660] sm:$0xff] %vm1830, %v1572
        %2036 = vst.msk [vmem:[%s204 + $0x668] sm:$0xff] %vm1830, %v1577
        %2037 = vst.msk [vmem:[%s204 + $0x670] sm:$0xff] %vm1830, %v1582
        %2038 = vst.msk [vmem:[%s204 + $0x678] sm:$0xff] %vm1830, %v1587
        %2039 = vst.msk [vmem:[%s204 + $0x680] sm:$0xff] %vm1830, %v1592
        %2040 = vst.msk [vmem:[%s204 + $0x688] sm:$0xff] %vm1830, %v1597
        %2041 = vst.msk [vmem:[%s204 + $0x690] sm:$0xff] %vm1830, %v1602
        %2042 = vst.msk [vmem:[%s204 + $0x698] sm:$0xff] %vm1830, %v1607
        %2043 = vst.msk [vmem:[%s204 + $0x6a0] sm:$0xff] %vm1830, %v1612
        %2044 = vst.msk [vmem:[%s204 + $0x6a8] sm:$0xff] %vm1830, %v1617
        %2045 = vst.msk [vmem:[%s204 + $0x6b0] sm:$0xff] %vm1830, %v1622
        %2046 = vst.msk [vmem:[%s204 + $0x6b8] sm:$0xff] %vm1830, %v1627
        %2047 = vst.msk [vmem:[%s204 + $0x6c0] sm:$0xff] %vm1830, %v1632
        %2048 = vst.msk [vmem:[%s204 + $0x6c8] sm:$0xff] %vm1830, %v1637
        %2049 = vst.msk [vmem:[%s204 + $0x6d0] sm:$0xff] %vm1830, %v1642
        %2050 = vst.msk [vmem:[%s204 + $0x6d8] sm:$0xff] %vm1830, %v1647
        %2051 = vst.msk [vmem:[%s204 + $0x6e0] sm:$0xff] %vm1830, %v1652
        %2052 = vst.msk [vmem:[%s204 + $0x6e8] sm:$0xff] %vm1830, %v1657
        %2053 = vst.msk [vmem:[%s204 + $0x6f0] sm:$0xff] %vm1830, %v1662
        %2054 = vst.msk [vmem:[%s204 + $0x6f8] sm:$0xff] %vm1830, %v1667
        %2055 = vst.msk [vmem:[%s204 + $0x700] sm:$0xff] %vm1830, %v1672
        %2056 = vst.msk [vmem:[%s204 + $0x708] sm:$0xff] %vm1830, %v1677
        %2057 = vst.msk [vmem:[%s204 + $0x710] sm:$0xff] %vm1830, %v1682
        %2058 = vst.msk [vmem:[%s204 + $0x718] sm:$0xff] %vm1830, %v1687
        %2059 = vst.msk [vmem:[%s204 + $0x720] sm:$0xff] %vm1830, %v1692
        %2060 = vst.msk [vmem:[%s204 + $0x728] sm:$0xff] %vm1830, %v1697
        %2061 = vst.msk [vmem:[%s204 + $0x730] sm:$0xff] %vm1830, %v1702
        %2062 = vst.msk [vmem:[%s204 + $0x738] sm:$0xff] %vm1830, %v1707
        %2063 = vst.msk [vmem:[%s204 + $0x740] sm:$0xff] %vm1830, %v1712
        %2064 = vst.msk [vmem:[%s204 + $0x748] sm:$0xff] %vm1830, %v1717
        %2065 = vst.msk [vmem:[%s204 + $0x750] sm:$0xff] %vm1830, %v1722
        %2066 = vst.msk [vmem:[%s204 + $0x758] sm:$0xff] %vm1830, %v1727
        %2067 = vst.msk [vmem:[%s204 + $0x760] sm:$0xff] %vm1830, %v1732
        %2068 = vst.msk [vmem:[%s204 + $0x768] sm:$0xff] %vm1830, %v1737
        %2069 = vst.msk [vmem:[%s204 + $0x770] sm:$0xff] %vm1830, %v1742
        %2070 = vst.msk [vmem:[%s204 + $0x778] sm:$0xff] %vm1830, %v1747
        %2071 = vst.msk [vmem:[%s204 + $0x780] sm:$0xff] %vm1830, %v1752
        %2072 = vst.msk [vmem:[%s204 + $0x788] sm:$0xff] %vm1830, %v1757
        %2073 = vst.msk [vmem:[%s204 + $0x790] sm:$0xff] %vm1830, %v1762
        %2074 = vst.msk [vmem:[%s204 + $0x798] sm:$0xff] %vm1830, %v1767
        %2075 = vst.msk [vmem:[%s204 + $0x7a0] sm:$0xff] %vm1830, %v1772
        %2076 = vst.msk [vmem:[%s204 + $0x7a8] sm:$0xff] %vm1830, %v1777
        %2077 = vst.msk [vmem:[%s204 + $0x7b0] sm:$0xff] %vm1830, %v1782
        %2078 = vst.msk [vmem:[%s204 + $0x7b8] sm:$0xff] %vm1830, %v1787
        %2079 = vst.msk [vmem:[%s204 + $0x7c0] sm:$0xff] %vm1830, %v1792
        %2080 = vst.msk [vmem:[%s204 + $0x7c8] sm:$0xff] %vm1830, %v1797
        %2081 = vst.msk [vmem:[%s204 + $0x7d0] sm:$0xff] %vm1830, %v1802
        %2082 = vst.msk [vmem:[%s204 + $0x7d8] sm:$0xff] %vm1830, %v1807
        %2083 = vst.msk [vmem:[%s204 + $0x7e0] sm:$0xff] %vm1830, %v1812
        %2084 = vst.msk [vmem:[%s204 + $0x7e8] sm:$0xff] %vm1830, %v1817
        %2085 = vst.msk [vmem:[%s204 + $0x7f0] sm:$0xff] %vm1830, %v1822
        %2086 = vst.msk [vmem:[%s204 + $0x7f8] sm:$0xff] %vm1830, %v1827
        %s2087 = smul.u32 256, %s18
        %p2088 = scmp.lt.s32.totalorder %s2087, 511
        %s2089 = scalar_select %p2088, %s2087, 511
        %s2090 = smul.addr %s2089, 8
        %s2091 = scalar_lea.vmem %s3, %s2090
        // Predicated region
        $region41: #{tpu_custom_call.1} parent=31 // pred_check
          %p2092 = pneg %p104
        $region42: #{tpu_custom_call.1} parent=31 // pred_check_branch
          %2094 = sbr.rel (%p2092) target = $region44
        $region43: #{tpu_custom_call.1} parent=31 // pred_region
          %s2095 = smul.u32 256, %s18
        $region44: #{tpu_custom_call.1} parent=31 // pred_fallthru
          _
      $region32: #{tpu_custom_call.1} parent=5 // pred_fallthru
        _
      %p2096 = scmp.le.s32.totalorder 2, %s13
      // Predicated region
      $region45: #{tpu_custom_call.1} parent=5 // pred_check
        %p2097 = pneg %p2096
      $region46: #{tpu_custom_call.1} parent=5 // pred_check_branch
        %2099 = sbr.rel (%p2097) target = $region48
      $region47: #{tpu_custom_call.1} parent=5 // pred_region
        %s2100 = ssub.s32 %s13, 2
        // Predicated region
        $region49: #{tpu_custom_call.1} parent=47 // pred_check
          %p2101 = pneg %p110
        $region50: #{tpu_custom_call.1} parent=47 // pred_check_branch
          %2103 = sbr.rel (%p2101) target = $region52
        $region51: #{tpu_custom_call.1} parent=47 // pred_region
          %s2104 = smul.u32 256, %s19
          %p2105 = scmp.lt.s32.totalorder %s2104, 511
          %s2106 = scalar_select %p2105, %s2104, 511
          %s2107 = smul.addr %s2106, 8
          %s2108 = scalar_lea.vmem %s3, %s2107
        $region52: #{tpu_custom_call.1} parent=47 // pred_fallthru
          _
      $region48: #{tpu_custom_call.1} parent=5 // pred_fallthru
        _
    $region6: #{tpu_custom_call.1} parent=1 // loop_footer
      %s17 = sadd.s32 1, %s13
    $region7: #{tpu_custom_call.1} parent=1 // loop_footer_branch
      %12 = sbr.rel target = $region3
    $region8: #{tpu_custom_call.1} parent=1 // loop_exit
      _
    %2109 = vsyncpa [#allocation3], 1
    %s2110 = scalar_lea.sflag [#allocation3], 1
    %2111 = vsyncpa %s2110, 1
    %2112 = vsyncpa [#allocation5], 1

</llo_original>
